<compile_context>
chip_gen: v7x
topology: tpu7x:2x2x1
jax: 0.10.0
libtpu: 0.0.40
codegen_flags: <defaults>
</compile_context>

<pallas_src>
import math

import numpy as np
import jax
import jax.numpy as jnp
from jax.experimental import pallas as pl
from jax.experimental.pallas import tpu as pltpu

NUM_STEPS = 10
NUMS = [8, 8, 8, 8]
NUM_HEADS = len(NUMS)
GROUP = NUMS[0]                 # 8
TOTAL_EMB = sum(NUMS)           # 32
EMB_DIM = 16
HID = 64
TEMP = 2.0                      # sqrt() Gumbel-softmax rewrite is exact for temp == 2
EPS = 1e-20
K_COORD = NUM_STEPS ** 3        # 1000
K_PAD = 1024                    # codebook padded to 8*128 lanes
NEG_INF = -1e9
LOG_K = math.log(K_COORD)
LOG_G = math.log(GROUP)


def get_grid(n):
    x = np.linspace(0, 1.5, n)
    y = np.linspace(0, 1.5, n)
    z = np.linspace(0, 1.5, n)
    grid = np.meshgrid(x, y, z)
    grid = np.stack(grid, axis=-1)
    return grid  # (n, n, n, 3)


def _round_up(a, b):
    return ((a + b - 1) // b) * b


# --------------------------------- kernel ---------------------------------

def coord_quantizer_kernel(x_ref, nc_ref, nh_ref,            # streamed tiles
                           vt_ref, bias_ref, v_ref, we1_ref, e2_ref,  # resident
                           o_ref, loss_ref):                  # outputs
    tn = x_ref.shape[0]
    x = x_ref[...]                                            # (TN, 64) bf16

    # ---------------- coordinate-codebook path ----------------
    logits = jnp.dot(x, vt_ref[...],
                     preferred_element_type=jnp.float32)      # (TN, 1024)
    logits = logits + bias_ref[...]                           # -1e9 on padded cols

    m = jnp.max(logits, axis=-1, keepdims=True)
    s = logits - m
    e = jnp.exp(s)                                            # single exp pass
    z = jnp.sum(e, axis=-1, keepdims=True)                    # (TN, 1), >= 1
    logz = jnp.log(z)
    logp = s - logz
    p = e * (1.0 / z)
    # KLDiv(log_uniform, logp) summed = sum(p*logp) + rows*log(K) (rows added below)
    kl_c = jnp.sum(p * logp)

    # Gumbel-softmax at temperature 2:  softmax((logp+g)/2) == normalize(sqrt(e/(E+eps)))
    E = -jnp.log(nc_ref[...] + EPS) + EPS                     # E > 0 strictly
    r = jnp.sqrt(e / E)                                       # padded cols: e == 0 -> r == 0
    soft = r * (1.0 / jnp.sum(r, axis=-1, keepdims=True))
    qc = jnp.dot(soft.astype(jnp.bfloat16), v_ref[...],
                 preferred_element_type=jnp.float32)          # (TN, 64)

    # ---------------- per-head embedding path ----------------
    # li[:, 8h:8(h+1)] = x @ W_h.T @ emb_h.T   (W_all @ E1 folded in the wrapper)
    li = jnp.dot(x, we1_ref[...], preferred_element_type=jnp.float32)   # (TN, 32)
    uh = nh_ref[...]                                          # (TN, 32) uniforms

    kl_p = 0.0
    parts = []
    for h in range(NUM_HEADS):                                # unrolled, tiny slices
        lo, hi = GROUP * h, GROUP * (h + 1)
        lh = li[:, lo:hi]                                     # (TN, 8)
        mh = jnp.max(lh, axis=-1, keepdims=True)              # per-head max (robust)
        sh = lh - mh
        eh = jnp.exp(sh)
        zh = jnp.sum(eh, axis=-1, keepdims=True)              # >= 1, no underflow
        ph = eh * (1.0 / zh)
        kl_p = kl_p + jnp.sum(ph * (sh - jnp.log(zh)))

        Eh = -jnp.log(uh[:, lo:hi] + EPS) + EPS
        rh = jnp.sqrt(eh / Eh)
        sih = rh * (1.0 / jnp.sum(rh, axis=-1, keepdims=True))
        parts.append(sih)

    sih_all = jnp.concatenate(parts, axis=-1).astype(jnp.bfloat16)      # (TN, 32)
    q = jnp.dot(sih_all, e2_ref[...], preferred_element_type=jnp.float32)  # (TN, 64)

    # ---------------- outputs ----------------
    # Lane-dense (TN, 128) output: [quantized | quantized_coord].
    o_ref[...] = jnp.concatenate([q, qc], axis=-1)

    # Per-tile partial loss.  Zero-padded rows contribute exactly 0 (uniform
    # softmax cancels the log(K)/log(8) constants), so tn * const is exact.
    loss_tile = (kl_c + kl_p + float(tn) * (LOG_K + NUM_HEADS * LOG_G)) / 5.0
    loss_ref[...] = jnp.zeros((1, 1, 128), jnp.float32) + loss_tile
    # TODO(synk): p_dis / argmax samples are computed inside the torch module
    # but not returned by forward(), so they are intentionally not materialized.


# --------------------------------- wrapper ---------------------------------

def init_params(key):
    k1, k2, k3, k4 = jax.random.split(key, 4)
    # nn.Linear(3, 64): uniform(-1/sqrt(3), 1/sqrt(3))
    b3 = 1.0 / np.sqrt(3.0)
    w_lin = jax.random.uniform(k1, (HID, 3), jnp.float32, -b3, b3)
    b_lin = jax.random.uniform(k2, (HID,), jnp.float32, -b3, b3)
    # emb_spaces = normalize(randn(32, 16), dim=-1)
    emb = jax.random.normal(k3, (TOTAL_EMB, EMB_DIM), jnp.float32)
    emb = emb / jnp.linalg.norm(emb, axis=-1, keepdims=True)
    # 4 x Linear(64, 16, bias=False)
    b64 = 1.0 / np.sqrt(64.0)
    w_heads = jax.random.uniform(k4, (NUM_HEADS, EMB_DIM, HID), jnp.float32, -b64, b64)
    return w_lin, b_lin, emb, w_heads


def coord_quantizer_forward(inputs, params, key, row_tile=256):
    w_lin, b_lin, emb, w_heads = params
    B, S, D = inputs.shape
    assert D == HID
    N = B * S

    # Row tile: multiple of 16 (bf16 sublane packing), <= 256 so the default
    # scoped VMEM limits are safe on v5e/v6e/v7x; try to give v7x's two cores
    # at least two tiles when the input is big enough.
    tn = min(int(row_tile), _round_up(N, 16))
    if _round_up(N, tn) // tn == 1 and tn >= 64:
        tn = max(32, _round_up((N + 1) // 2, 16))
    n_pad = _round_up(N, tn)
    num_tiles = n_pad // tn

    # ---- parameter glue (plain JAX) ----
    grid_pts = jnp.asarray(get_grid(NUM_STEPS), jnp.float32).reshape(-1, 3)
    vecs = grid_pts @ w_lin.T + b_lin                          # (1000, 64)
    vecs_pad = jnp.zeros((K_PAD, HID), jnp.float32).at[:K_COORD].set(vecs)
    v_bf = vecs_pad.astype(jnp.bfloat16)                       # (1024, 64)
    vt_bf = vecs_pad.T.astype(jnp.bfloat16)                    # (64, 1024)

    # Additive bias row masking padded logit columns.
    bias = jnp.where(jnp.arange(K_PAD) < K_COORD, 0.0, NEG_INF)
    bias = bias.reshape(1, K_PAD).astype(jnp.float32)

    # Fused head-logit matrix: we1[:, 8h:8(h+1)] = W_h.T @ emb_h.T  (64, 32)
    we1_cols = []
    e2 = jnp.zeros((TOTAL_EMB, NUM_HEADS * EMB_DIM), jnp.float32)  # (32, 64)
    for i in range(NUM_HEADS):
        blk = emb[GROUP * i:GROUP * (i + 1)]                   # (8, 16)
        we1_cols.append(w_heads[i].T @ blk.T)                  # (64, 8)
        e2 = e2.at[GROUP * i:GROUP * (i + 1),
                   EMB_DIM * i:EMB_DIM * (i + 1)].set(blk)
    we1_bf = jnp.concatenate(we1_cols, axis=-1).astype(jnp.bfloat16)   # (64, 32)
    e2_bf = e2.astype(jnp.bfloat16)

    # Inputs streamed as bf16 (they are only ever used as MXU bf16 operands).
    x = inputs.reshape(N, HID).astype(jnp.bfloat16)
    x_pad = jnp.zeros((n_pad, HID), jnp.bfloat16).at[:N].set(x)

    # Gumbel uniforms generated in JAX (in-kernel TPU PRNG is not available in
    # the interpret path); full padded shapes keep E strictly positive everywhere.
    kc, kh = jax.random.split(key)
    u_coord = jax.random.uniform(kc, (n_pad, K_PAD), jnp.float32)
    u_head = jax.random.uniform(kh, (n_pad, TOTAL_EMB), jnp.float32)

    o, loss_parts = pl.pallas_call(
        coord_quantizer_kernel,
        grid=(num_tiles,),
        in_specs=[
            pl.BlockSpec((tn, HID), lambda i: (i, 0)),                 # x tile (bf16)
            pl.BlockSpec((tn, K_PAD), lambda i: (i, 0)),               # coord uniforms
            pl.BlockSpec((tn, TOTAL_EMB), lambda i: (i, 0)),           # head uniforms
            pl.BlockSpec((HID, K_PAD), lambda i: (0, 0)),              # vecs.T (resident)
            pl.BlockSpec((1, K_PAD), lambda i: (0, 0)),                # pad bias row
            pl.BlockSpec((K_PAD, HID), lambda i: (0, 0)),              # vecs (resident)
            pl.BlockSpec((HID, TOTAL_EMB), lambda i: (0, 0)),          # fused W@E1
            pl.BlockSpec((TOTAL_EMB, HID), lambda i: (0, 0)),          # block-diag E2
        ],
        out_specs=[
            pl.BlockSpec((tn, 2 * HID), lambda i: (i, 0)),             # [q | qc]
            pl.BlockSpec((1, 1, 128), lambda i: (i, 0, 0)),            # partial loss
        ],
        out_shape=(
            jax.ShapeDtypeStruct((n_pad, 2 * HID), jnp.float32),
            jax.ShapeDtypeStruct((num_tiles, 1, 128), jnp.float32),
        ),
        compiler_params=pltpu.CompilerParams(
            dimension_semantics=("parallel",),
            vmem_limit_bytes=48 * 1024 * 1024,
        ),
    )(x_pad, u_coord, u_head, vt_bf, bias, v_bf, we1_bf, e2_bf)

    quantized = o[:N, :HID].reshape(B, S, HID)
    quantized_coord = o[:N, HID:].reshape(B, S, HID)
    loss = jnp.sum(loss_parts[:, 0, 0])
    return quantized, quantized_coord, loss


if __name__ == "__main__":
    key = jax.random.PRNGKey(0)
    k_param, k_in, k_noise = jax.random.split(key, 3)

    params = init_params(k_param)
    # small shapes: batch=2, seq=8, hidden=64 (hidden fixed by the module)
    inputs = jax.random.normal(k_in, (2, 8, HID), jnp.float32)

    quantized, quantized_coord, loss = coord_quantizer_forward(inputs, params, k_noise)
    jax.block_until_ready((quantized, quantized_coord, loss))

    assert quantized.shape == (2, 8, 64)
    assert quantized_coord.shape == (2, 8, 64)
    assert loss.shape == ()
    assert bool(jnp.isfinite(loss))
    assert bool(jnp.all(jnp.isfinite(quantized)))
    assert bool(jnp.all(jnp.isfinite(quantized_coord)))
    print("KERNEL_OK")
</pallas_src>

<mosaic_0001>
module attributes {stable_mosaic.version = 11 : i64} {
  func.func @coord_quantizer_kernel(%arg0: i32, %arg1: memref<16x64xbf16, #tpu.memory_space<vmem>>, %arg2: memref<16x1024xf32, #tpu.memory_space<vmem>>, %arg3: memref<16x32xf32, #tpu.memory_space<vmem>>, %arg4: memref<64x1024xbf16, #tpu.memory_space<vmem>>, %arg5: memref<1x1024xf32, #tpu.memory_space<vmem>>, %arg6: memref<1024x64xbf16, #tpu.memory_space<vmem>>, %arg7: memref<64x32xbf16, #tpu.memory_space<vmem>>, %arg8: memref<32x64xbf16, #tpu.memory_space<vmem>>, %arg9: memref<16x128xf32, #tpu.memory_space<vmem>>, %arg10: memref<1x1x128xf32, #tpu.memory_space<vmem>>) attributes {dimension_semantics = [#tpu.dimension_semantics<parallel>], iteration_bounds = array<i64: 1>, scalar_prefetch = 0 : i64, scratch_operands = 0 : i64, tpu.core_type = #tpu.core_type<tc>, window_params = [{transform_indices = @transform_0, window_bounds = array<i64: 16, 64>}, {transform_indices = @transform_1, window_bounds = array<i64: 16, 1024>}, {transform_indices = @transform_2, window_bounds = array<i64: 16, 32>}, {pipeline_mode = #tpu.pipeline_mode<synchronous>, transform_indices = @transform_3, window_bounds = array<i64: 64, 1024>}, {pipeline_mode = #tpu.pipeline_mode<synchronous>, transform_indices = @transform_4, window_bounds = array<i64: 1, 1024>}, {pipeline_mode = #tpu.pipeline_mode<synchronous>, transform_indices = @transform_5, window_bounds = array<i64: 1024, 64>}, {pipeline_mode = #tpu.pipeline_mode<synchronous>, transform_indices = @transform_6, window_bounds = array<i64: 64, 32>}, {pipeline_mode = #tpu.pipeline_mode<synchronous>, transform_indices = @transform_7, window_bounds = array<i64: 32, 64>}, {transform_indices = @transform_8, window_bounds = array<i64: 16, 128>}, {transform_indices = @transform_9, window_bounds = array<i64: 1, 1, 128>}]} {
    %c0 = arith.constant 0 : index
    %c0_0 = arith.constant 0 : index
    %0 = vector.load %arg1[%c0, %c0_0] : memref<16x64xbf16, #tpu.memory_space<vmem>>, vector<16x64xbf16>
    %c0_1 = arith.constant 0 : index
    %c0_2 = arith.constant 0 : index
    %1 = vector.load %arg4[%c0_1, %c0_2] : memref<64x1024xbf16, #tpu.memory_space<vmem>>, vector<64x1024xbf16>
    %cst = arith.constant dense<0.000000e+00> : vector<16x1024xf32>
    %2 = tpu.matmul %0, %1, %cst {dimension_numbers = #tpu.dot_dimension_numbers<[1], [0], [0], [1], [0, 0, 1, 1], [], []>} : vector<16x64xbf16>, vector<64x1024xbf16>, vector<16x1024xf32> -> vector<16x1024xf32>
    %c0_3 = arith.constant 0 : index
    %c0_4 = arith.constant 0 : index
    %3 = vector.load %arg5[%c0_3, %c0_4] : memref<1x1024xf32, #tpu.memory_space<vmem>>, vector<1x1024xf32>
    %4 = vector.broadcast %3 : vector<1x1024xf32> to vector<16x1024xf32>
    %5 = arith.addf %2, %4 : vector<16x1024xf32>
    %cst_5 = arith.constant dense<0xFF800000> : vector<16xf32>
    %6 = vector.multi_reduction <maximumf>, %5, %cst_5 [1] : vector<16x1024xf32> to vector<16xf32>
    %7 = vector.shape_cast %6 : vector<16xf32> to vector<16x1xf32>
    %8 = vector.broadcast %7 : vector<16x1xf32> to vector<16x1024xf32>
    %9 = arith.subf %5, %8 : vector<16x1024xf32>
    %10 = math.exp %9 : vector<16x1024xf32>
    %cst_6 = arith.constant dense<0.000000e+00> : vector<16xf32>
    %11 = vector.multi_reduction <add>, %10, %cst_6 [1] : vector<16x1024xf32> to vector<16xf32>
    %12 = vector.shape_cast %11 : vector<16xf32> to vector<16x1xf32>
    %13 = math.log %12 : vector<16x1xf32>
    %14 = vector.broadcast %13 : vector<16x1xf32> to vector<16x1024xf32>
    %15 = arith.subf %9, %14 : vector<16x1024xf32>
    %cst_7 = arith.constant 1.000000e+00 : f32
    %16 = vector.broadcast %cst_7 : f32 to vector<16x1xf32>
    %17 = arith.divf %16, %12 : vector<16x1xf32>
    %18 = vector.broadcast %17 : vector<16x1xf32> to vector<16x1024xf32>
    %19 = arith.mulf %10, %18 : vector<16x1024xf32>
    %20 = arith.mulf %19, %15 : vector<16x1024xf32>
    %21 = vector.shape_cast %20 : vector<16x1024xf32> to vector<1x16x1024xf32>
    %cst_8 = arith.constant dense<0.000000e+00> : vector<1xf32>
    %22 = vector.multi_reduction <add>, %21, %cst_8 [1, 2] : vector<1x16x1024xf32> to vector<1xf32>
    %23 = vector.shape_cast %22 : vector<1xf32> to vector<1x1x1xf32>
    %24 = vector.extract %23[0, 0, 0] : f32 from vector<1x1x1xf32>
    %c0_9 = arith.constant 0 : index
    %c0_10 = arith.constant 0 : index
    %25 = vector.load %arg2[%c0_9, %c0_10] : memref<16x1024xf32, #tpu.memory_space<vmem>>, vector<16x1024xf32>
    %cst_11 = arith.constant 9.99999968E-21 : f32
    %26 = vector.broadcast %cst_11 : f32 to vector<16x1024xf32>
    %27 = arith.addf %25, %26 : vector<16x1024xf32>
    %28 = math.log %27 : vector<16x1024xf32>
    %cst_12 = arith.constant 0.000000e+00 : f32
    %29 = vector.broadcast %cst_12 : f32 to vector<16x1024xf32>
    %30 = arith.subf %29, %28 : vector<16x1024xf32>
    %cst_13 = arith.constant 9.99999968E-21 : f32
    %31 = vector.broadcast %cst_13 : f32 to vector<16x1024xf32>
    %32 = arith.addf %30, %31 : vector<16x1024xf32>
    %33 = arith.divf %10, %32 : vector<16x1024xf32>
    %34 = math.sqrt %33 : vector<16x1024xf32>
    %cst_14 = arith.constant dense<0.000000e+00> : vector<16xf32>
    %35 = vector.multi_reduction <add>, %34, %cst_14 [1] : vector<16x1024xf32> to vector<16xf32>
    %36 = vector.shape_cast %35 : vector<16xf32> to vector<16x1xf32>
    %cst_15 = arith.constant 1.000000e+00 : f32
    %37 = vector.broadcast %cst_15 : f32 to vector<16x1xf32>
    %38 = arith.divf %37, %36 : vector<16x1xf32>
    %39 = vector.broadcast %38 : vector<16x1xf32> to vector<16x1024xf32>
    %40 = arith.mulf %34, %39 : vector<16x1024xf32>
    %41 = arith.truncf %40 : vector<16x1024xf32> to vector<16x1024xbf16>
    %c0_16 = arith.constant 0 : index
    %c0_17 = arith.constant 0 : index
    %42 = vector.load %arg6[%c0_16, %c0_17] : memref<1024x64xbf16, #tpu.memory_space<vmem>>, vector<1024x64xbf16>
    %cst_18 = arith.constant dense<0.000000e+00> : vector<16x64xf32>
    %43 = tpu.matmul %41, %42, %cst_18 {dimension_numbers = #tpu.dot_dimension_numbers<[1], [0], [0], [1], [0, 0, 1, 1], [], []>} : vector<16x1024xbf16>, vector<1024x64xbf16>, vector<16x64xf32> -> vector<16x64xf32>
    %c0_19 = arith.constant 0 : index
    %c0_20 = arith.constant 0 : index
    %44 = vector.load %arg7[%c0_19, %c0_20] : memref<64x32xbf16, #tpu.memory_space<vmem>>, vector<64x32xbf16>
    %cst_21 = arith.constant dense<0.000000e+00> : vector<16x32xf32>
    %45 = tpu.matmul %0, %44, %cst_21 {dimension_numbers = #tpu.dot_dimension_numbers<[1], [0], [0], [1], [0, 0, 1, 1], [], []>} : vector<16x64xbf16>, vector<64x32xbf16>, vector<16x32xf32> -> vector<16x32xf32>
    %c0_22 = arith.constant 0 : index
    %c0_23 = arith.constant 0 : index
    %46 = vector.load %arg3[%c0_22, %c0_23] : memref<16x32xf32, #tpu.memory_space<vmem>>, vector<16x32xf32>
    %47 = vector.extract_strided_slice %45 {offsets = [0, 0], sizes = [16, 8], strides = [1, 1]} : vector<16x32xf32> to vector<16x8xf32>
    %cst_24 = arith.constant dense<0xFF800000> : vector<16xf32>
    %48 = vector.multi_reduction <maximumf>, %47, %cst_24 [1] : vector<16x8xf32> to vector<16xf32>
    %49 = vector.shape_cast %48 : vector<16xf32> to vector<16x1xf32>
    %50 = vector.broadcast %49 : vector<16x1xf32> to vector<16x8xf32>
    %51 = arith.subf %47, %50 : vector<16x8xf32>
    %52 = math.exp %51 : vector<16x8xf32>
    %cst_25 = arith.constant dense<0.000000e+00> : vector<16xf32>
    %53 = vector.multi_reduction <add>, %52, %cst_25 [1] : vector<16x8xf32> to vector<16xf32>
    %54 = vector.shape_cast %53 : vector<16xf32> to vector<16x1xf32>
    %cst_26 = arith.constant 1.000000e+00 : f32
    %55 = vector.broadcast %cst_26 : f32 to vector<16x1xf32>
    %56 = arith.divf %55, %54 : vector<16x1xf32>
    %57 = vector.broadcast %56 : vector<16x1xf32> to vector<16x8xf32>
    %58 = arith.mulf %52, %57 : vector<16x8xf32>
    %59 = math.log %54 : vector<16x1xf32>
    %60 = vector.broadcast %59 : vector<16x1xf32> to vector<16x8xf32>
    %61 = arith.subf %51, %60 : vector<16x8xf32>
    %62 = arith.mulf %58, %61 : vector<16x8xf32>
    %63 = vector.shape_cast %62 : vector<16x8xf32> to vector<1x16x8xf32>
    %cst_27 = arith.constant dense<0.000000e+00> : vector<1xf32>
    %64 = vector.multi_reduction <add>, %63, %cst_27 [1, 2] : vector<1x16x8xf32> to vector<1xf32>
    %65 = vector.shape_cast %64 : vector<1xf32> to vector<1x1x1xf32>
    %66 = vector.extract %65[0, 0, 0] : f32 from vector<1x1x1xf32>
    %cst_28 = arith.constant 0.000000e+00 : f32
    %67 = arith.addf %cst_28, %66 : f32
    %68 = vector.extract_strided_slice %46 {offsets = [0, 0], sizes = [16, 8], strides = [1, 1]} : vector<16x32xf32> to vector<16x8xf32>
    %cst_29 = arith.constant 9.99999968E-21 : f32
    %69 = vector.broadcast %cst_29 : f32 to vector<16x8xf32>
    %70 = arith.addf %68, %69 : vector<16x8xf32>
    %71 = math.log %70 : vector<16x8xf32>
    %cst_30 = arith.constant 0.000000e+00 : f32
    %72 = vector.broadcast %cst_30 : f32 to vector<16x8xf32>
    %73 = arith.subf %72, %71 : vector<16x8xf32>
    %cst_31 = arith.constant 9.99999968E-21 : f32
    %74 = vector.broadcast %cst_31 : f32 to vector<16x8xf32>
    %75 = arith.addf %73, %74 : vector<16x8xf32>
    %76 = arith.divf %52, %75 : vector<16x8xf32>
    %77 = math.sqrt %76 : vector<16x8xf32>
    %cst_32 = arith.constant dense<0.000000e+00> : vector<16xf32>
    %78 = vector.multi_reduction <add>, %77, %cst_32 [1] : vector<16x8xf32> to vector<16xf32>
    %79 = vector.shape_cast %78 : vector<16xf32> to vector<16x1xf32>
    %cst_33 = arith.constant 1.000000e+00 : f32
    %80 = vector.broadcast %cst_33 : f32 to vector<16x1xf32>
    %81 = arith.divf %80, %79 : vector<16x1xf32>
    %82 = vector.broadcast %81 : vector<16x1xf32> to vector<16x8xf32>
    %83 = arith.mulf %77, %82 : vector<16x8xf32>
    %84 = vector.extract_strided_slice %45 {offsets = [0, 8], sizes = [16, 8], strides = [1, 1]} : vector<16x32xf32> to vector<16x8xf32>
    %cst_34 = arith.constant dense<0xFF800000> : vector<16xf32>
    %85 = vector.multi_reduction <maximumf>, %84, %cst_34 [1] : vector<16x8xf32> to vector<16xf32>
    %86 = vector.shape_cast %85 : vector<16xf32> to vector<16x1xf32>
    %87 = vector.broadcast %86 : vector<16x1xf32> to vector<16x8xf32>
    %88 = arith.subf %84, %87 : vector<16x8xf32>
    %89 = math.exp %88 : vector<16x8xf32>
    %cst_35 = arith.constant dense<0.000000e+00> : vector<16xf32>
    %90 = vector.multi_reduction <add>, %89, %cst_35 [1] : vector<16x8xf32> to vector<16xf32>
    %91 = vector.shape_cast %90 : vector<16xf32> to vector<16x1xf32>
    %cst_36 = arith.constant 1.000000e+00 : f32
    %92 = vector.broadcast %cst_36 : f32 to vector<16x1xf32>
    %93 = arith.divf %92, %91 : vector<16x1xf32>
    %94 = vector.broadcast %93 : vector<16x1xf32> to vector<16x8xf32>
    %95 = arith.mulf %89, %94 : vector<16x8xf32>
    %96 = math.log %91 : vector<16x1xf32>
    %97 = vector.broadcast %96 : vector<16x1xf32> to vector<16x8xf32>
    %98 = arith.subf %88, %97 : vector<16x8xf32>
    %99 = arith.mulf %95, %98 : vector<16x8xf32>
    %100 = vector.shape_cast %99 : vector<16x8xf32> to vector<1x16x8xf32>
    %cst_37 = arith.constant dense<0.000000e+00> : vector<1xf32>
    %101 = vector.multi_reduction <add>, %100, %cst_37 [1, 2] : vector<1x16x8xf32> to vector<1xf32>
    %102 = vector.shape_cast %101 : vector<1xf32> to vector<1x1x1xf32>
    %103 = vector.extract %102[0, 0, 0] : f32 from vector<1x1x1xf32>
    %104 = arith.addf %67, %103 : f32
    %105 = vector.extract_strided_slice %46 {offsets = [0, 8], sizes = [16, 8], strides = [1, 1]} : vector<16x32xf32> to vector<16x8xf32>
    %cst_38 = arith.constant 9.99999968E-21 : f32
    %106 = vector.broadcast %cst_38 : f32 to vector<16x8xf32>
    %107 = arith.addf %105, %106 : vector<16x8xf32>
    %108 = math.log %107 : vector<16x8xf32>
    %cst_39 = arith.constant 0.000000e+00 : f32
    %109 = vector.broadcast %cst_39 : f32 to vector<16x8xf32>
    %110 = arith.subf %109, %108 : vector<16x8xf32>
    %cst_40 = arith.constant 9.99999968E-21 : f32
    %111 = vector.broadcast %cst_40 : f32 to vector<16x8xf32>
    %112 = arith.addf %110, %111 : vector<16x8xf32>
    %113 = arith.divf %89, %112 : vector<16x8xf32>
    %114 = math.sqrt %113 : vector<16x8xf32>
    %cst_41 = arith.constant dense<0.000000e+00> : vector<16xf32>
    %115 = vector.multi_reduction <add>, %114, %cst_41 [1] : vector<16x8xf32> to vector<16xf32>
    %116 = vector.shape_cast %115 : vector<16xf32> to vector<16x1xf32>
    %cst_42 = arith.constant 1.000000e+00 : f32
    %117 = vector.broadcast %cst_42 : f32 to vector<16x1xf32>
    %118 = arith.divf %117, %116 : vector<16x1xf32>
    %119 = vector.broadcast %118 : vector<16x1xf32> to vector<16x8xf32>
    %120 = arith.mulf %114, %119 : vector<16x8xf32>
    %121 = vector.extract_strided_slice %45 {offsets = [0, 16], sizes = [16, 8], strides = [1, 1]} : vector<16x32xf32> to vector<16x8xf32>
    %cst_43 = arith.constant dense<0xFF800000> : vector<16xf32>
    %122 = vector.multi_reduction <maximumf>, %121, %cst_43 [1] : vector<16x8xf32> to vector<16xf32>
    %123 = vector.shape_cast %122 : vector<16xf32> to vector<16x1xf32>
    %124 = vector.broadcast %123 : vector<16x1xf32> to vector<16x8xf32>
    %125 = arith.subf %121, %124 : vector<16x8xf32>
    %126 = math.exp %125 : vector<16x8xf32>
    %cst_44 = arith.constant dense<0.000000e+00> : vector<16xf32>
    %127 = vector.multi_reduction <add>, %126, %cst_44 [1] : vector<16x8xf32> to vector<16xf32>
    %128 = vector.shape_cast %127 : vector<16xf32> to vector<16x1xf32>
    %cst_45 = arith.constant 1.000000e+00 : f32
    %129 = vector.broadcast %cst_45 : f32 to vector<16x1xf32>
    %130 = arith.divf %129, %128 : vector<16x1xf32>
    %131 = vector.broadcast %130 : vector<16x1xf32> to vector<16x8xf32>
    %132 = arith.mulf %126, %131 : vector<16x8xf32>
    %133 = math.log %128 : vector<16x1xf32>
    %134 = vector.broadcast %133 : vector<16x1xf32> to vector<16x8xf32>
    %135 = arith.subf %125, %134 : vector<16x8xf32>
    %136 = arith.mulf %132, %135 : vector<16x8xf32>
    %137 = vector.shape_cast %136 : vector<16x8xf32> to vector<1x16x8xf32>
    %cst_46 = arith.constant dense<0.000000e+00> : vector<1xf32>
    %138 = vector.multi_reduction <add>, %137, %cst_46 [1, 2] : vector<1x16x8xf32> to vector<1xf32>
    %139 = vector.shape_cast %138 : vector<1xf32> to vector<1x1x1xf32>
    %140 = vector.extract %139[0, 0, 0] : f32 from vector<1x1x1xf32>
    %141 = arith.addf %104, %140 : f32
    %142 = vector.extract_strided_slice %46 {offsets = [0, 16], sizes = [16, 8], strides = [1, 1]} : vector<16x32xf32> to vector<16x8xf32>
    %cst_47 = arith.constant 9.99999968E-21 : f32
    %143 = vector.broadcast %cst_47 : f32 to vector<16x8xf32>
    %144 = arith.addf %142, %143 : vector<16x8xf32>
    %145 = math.log %144 : vector<16x8xf32>
    %cst_48 = arith.constant 0.000000e+00 : f32
    %146 = vector.broadcast %cst_48 : f32 to vector<16x8xf32>
    %147 = arith.subf %146, %145 : vector<16x8xf32>
    %cst_49 = arith.constant 9.99999968E-21 : f32
    %148 = vector.broadcast %cst_49 : f32 to vector<16x8xf32>
    %149 = arith.addf %147, %148 : vector<16x8xf32>
    %150 = arith.divf %126, %149 : vector<16x8xf32>
    %151 = math.sqrt %150 : vector<16x8xf32>
    %cst_50 = arith.constant dense<0.000000e+00> : vector<16xf32>
    %152 = vector.multi_reduction <add>, %151, %cst_50 [1] : vector<16x8xf32> to vector<16xf32>
    %153 = vector.shape_cast %152 : vector<16xf32> to vector<16x1xf32>
    %cst_51 = arith.constant 1.000000e+00 : f32
    %154 = vector.broadcast %cst_51 : f32 to vector<16x1xf32>
    %155 = arith.divf %154, %153 : vector<16x1xf32>
    %156 = vector.broadcast %155 : vector<16x1xf32> to vector<16x8xf32>
    %157 = arith.mulf %151, %156 : vector<16x8xf32>
    %158 = vector.extract_strided_slice %45 {offsets = [0, 24], sizes = [16, 8], strides = [1, 1]} : vector<16x32xf32> to vector<16x8xf32>
    %cst_52 = arith.constant dense<0xFF800000> : vector<16xf32>
    %159 = vector.multi_reduction <maximumf>, %158, %cst_52 [1] : vector<16x8xf32> to vector<16xf32>
    %160 = vector.shape_cast %159 : vector<16xf32> to vector<16x1xf32>
    %161 = vector.broadcast %160 : vector<16x1xf32> to vector<16x8xf32>
    %162 = arith.subf %158, %161 : vector<16x8xf32>
    %163 = math.exp %162 : vector<16x8xf32>
    %cst_53 = arith.constant dense<0.000000e+00> : vector<16xf32>
    %164 = vector.multi_reduction <add>, %163, %cst_53 [1] : vector<16x8xf32> to vector<16xf32>
    %165 = vector.shape_cast %164 : vector<16xf32> to vector<16x1xf32>
    %cst_54 = arith.constant 1.000000e+00 : f32
    %166 = vector.broadcast %cst_54 : f32 to vector<16x1xf32>
    %167 = arith.divf %166, %165 : vector<16x1xf32>
    %168 = vector.broadcast %167 : vector<16x1xf32> to vector<16x8xf32>
    %169 = arith.mulf %163, %168 : vector<16x8xf32>
    %170 = math.log %165 : vector<16x1xf32>
    %171 = vector.broadcast %170 : vector<16x1xf32> to vector<16x8xf32>
    %172 = arith.subf %162, %171 : vector<16x8xf32>
    %173 = arith.mulf %169, %172 : vector<16x8xf32>
    %174 = vector.shape_cast %173 : vector<16x8xf32> to vector<1x16x8xf32>
    %cst_55 = arith.constant dense<0.000000e+00> : vector<1xf32>
    %175 = vector.multi_reduction <add>, %174, %cst_55 [1, 2] : vector<1x16x8xf32> to vector<1xf32>
    %176 = vector.shape_cast %175 : vector<1xf32> to vector<1x1x1xf32>
    %177 = vector.extract %176[0, 0, 0] : f32 from vector<1x1x1xf32>
    %178 = arith.addf %141, %177 : f32
    %179 = vector.extract_strided_slice %46 {offsets = [0, 24], sizes = [16, 8], strides = [1, 1]} : vector<16x32xf32> to vector<16x8xf32>
    %cst_56 = arith.constant 9.99999968E-21 : f32
    %180 = vector.broadcast %cst_56 : f32 to vector<16x8xf32>
    %181 = arith.addf %179, %180 : vector<16x8xf32>
    %182 = math.log %181 : vector<16x8xf32>
    %cst_57 = arith.constant 0.000000e+00 : f32
    %183 = vector.broadcast %cst_57 : f32 to vector<16x8xf32>
    %184 = arith.subf %183, %182 : vector<16x8xf32>
    %cst_58 = arith.constant 9.99999968E-21 : f32
    %185 = vector.broadcast %cst_58 : f32 to vector<16x8xf32>
    %186 = arith.addf %184, %185 : vector<16x8xf32>
    %187 = arith.divf %163, %186 : vector<16x8xf32>
    %188 = math.sqrt %187 : vector<16x8xf32>
    %cst_59 = arith.constant dense<0.000000e+00> : vector<16xf32>
    %189 = vector.multi_reduction <add>, %188, %cst_59 [1] : vector<16x8xf32> to vector<16xf32>
    %190 = vector.shape_cast %189 : vector<16xf32> to vector<16x1xf32>
    %cst_60 = arith.constant 1.000000e+00 : f32
    %191 = vector.broadcast %cst_60 : f32 to vector<16x1xf32>
    %192 = arith.divf %191, %190 : vector<16x1xf32>
    %193 = vector.broadcast %192 : vector<16x1xf32> to vector<16x8xf32>
    %194 = arith.mulf %188, %193 : vector<16x8xf32>
    %195 = tpu.concatenate %83, %120, %157, %194 in 1 : vector<16x8xf32>, vector<16x8xf32>, vector<16x8xf32>, vector<16x8xf32> -> vector<16x32xf32>
    %196 = arith.truncf %195 : vector<16x32xf32> to vector<16x32xbf16>
    %c0_61 = arith.constant 0 : index
    %c0_62 = arith.constant 0 : index
    %197 = vector.load %arg8[%c0_61, %c0_62] : memref<32x64xbf16, #tpu.memory_space<vmem>>, vector<32x64xbf16>
    %cst_63 = arith.constant dense<0.000000e+00> : vector<16x64xf32>
    %198 = tpu.matmul %196, %197, %cst_63 {dimension_numbers = #tpu.dot_dimension_numbers<[1], [0], [0], [1], [0, 0, 1, 1], [], []>} : vector<16x32xbf16>, vector<32x64xbf16>, vector<16x64xf32> -> vector<16x64xf32>
    %199 = tpu.concatenate %198, %43 in 1 : vector<16x64xf32>, vector<16x64xf32> -> vector<16x128xf32>
    %c0_64 = arith.constant 0 : index
    %c0_65 = arith.constant 0 : index
    %200 = vector.load %arg9[%c0_64, %c0_65] : memref<16x128xf32, #tpu.memory_space<vmem>>, vector<16x128xf32>
    tpu.vector_store %arg9[%c0_64, %c0_65], %199 {strides = array<i32>} : memref<16x128xf32, #tpu.memory_space<vmem>>, vector<16x128xf32>,
    %201 = arith.addf %24, %178 : f32
    %cst_66 = arith.constant 243.608337 : f32
    %202 = arith.addf %201, %cst_66 : f32
    %cst_67 = arith.constant 5.000000e+00 : f32
    %203 = arith.divf %202, %cst_67 : f32
    %cst_68 = arith.constant 0.000000e+00 : f32
    %204 = vector.broadcast %cst_68 : f32 to vector<1x1x128xf32>
    %205 = vector.broadcast %203 : f32 to vector<1x1x128xf32>
    %206 = arith.addf %204, %205 : vector<1x1x128xf32>
    %c0_69 = arith.constant 0 : index
    %c0_70 = arith.constant 0 : index
    %c0_71 = arith.constant 0 : index
    %207 = vector.load %arg10[%c0_69, %c0_70, %c0_71] : memref<1x1x128xf32, #tpu.memory_space<vmem>>, vector<1x1x128xf32>
    tpu.vector_store %arg10[%c0_69, %c0_70, %c0_71], %206 {strides = array<i32>} : memref<1x1x128xf32, #tpu.memory_space<vmem>>, vector<1x1x128xf32>,
    return
  }
  func.func @transform_0(%arg0: i32) -> (i32, i32) {
    %c0_i32 = arith.constant 0 : i32
    %c0_i32_0 = arith.constant 0 : i32
    return %arg0, %c0_i32 : i32, i32
  }
  func.func @transform_1(%arg0: i32) -> (i32, i32) {
    %c0_i32 = arith.constant 0 : i32
    %c0_i32_0 = arith.constant 0 : i32
    return %arg0, %c0_i32 : i32, i32
  }
  func.func @transform_2(%arg0: i32) -> (i32, i32) {
    %c0_i32 = arith.constant 0 : i32
    %c0_i32_0 = arith.constant 0 : i32
    return %arg0, %c0_i32 : i32, i32
  }
  func.func @transform_3(%arg0: i32) -> (i32, i32) {
    %c0_i32 = arith.constant 0 : i32
    %c0_i32_0 = arith.constant 0 : i32
    %c0_i32_1 = arith.constant 0 : i32
    return %c0_i32, %c0_i32_0 : i32, i32
  }
  func.func @transform_4(%arg0: i32) -> (i32, i32) {
    %c0_i32 = arith.constant 0 : i32
    %c0_i32_0 = arith.constant 0 : i32
    %c0_i32_1 = arith.constant 0 : i32
    return %c0_i32, %c0_i32_0 : i32, i32
  }
  func.func @transform_5(%arg0: i32) -> (i32, i32) {
    %c0_i32 = arith.constant 0 : i32
    %c0_i32_0 = arith.constant 0 : i32
    %c0_i32_1 = arith.constant 0 : i32
    return %c0_i32, %c0_i32_0 : i32, i32
  }
  func.func @transform_6(%arg0: i32) -> (i32, i32) {
    %c0_i32 = arith.constant 0 : i32
    %c0_i32_0 = arith.constant 0 : i32
    %c0_i32_1 = arith.constant 0 : i32
    return %c0_i32, %c0_i32_0 : i32, i32
  }
  func.func @transform_7(%arg0: i32) -> (i32, i32) {
    %c0_i32 = arith.constant 0 : i32
    %c0_i32_0 = arith.constant 0 : i32
    %c0_i32_1 = arith.constant 0 : i32
    return %c0_i32, %c0_i32_0 : i32, i32
  }
  func.func @transform_8(%arg0: i32) -> (i32, i32) {
    %c0_i32 = arith.constant 0 : i32
    %c0_i32_0 = arith.constant 0 : i32
    return %arg0, %c0_i32 : i32, i32
  }
  func.func @transform_9(%arg0: i32) -> (i32, i32, i32) {
    %c0_i32 = arith.constant 0 : i32
    %c0_i32_0 = arith.constant 0 : i32
    %c0_i32_1 = arith.constant 0 : i32
    return %arg0, %c0_i32, %c0_i32_0 : i32, i32, i32
  }
}

</mosaic_0001>

<llo_original>
// kernel: tpu_custom_call.1
$region0: #{tpu_custom_call.1}
  #allocation0 [shape = 'u32[]', space=smem, size = 0x4, offset = 0x4, fixed_abs, tag = 'smem constant byte address 0x4 - core index']
  #allocation1 [shape = 'u32[144,128]{1,0:T(1,128)}', space=vmem, size = 0x12000, scoped, tag = 'internal scratch']
  %s0 = inlined_call_operand.vmem [shape: bf16[16,64], index: 0, kind: input, shape index: {}]
  %s1 = inlined_call_operand.vmem [shape: f32[16,1024], index: 1, kind: input, shape index: {}]
  %s2 = inlined_call_operand.vmem [shape: f32[16,32], index: 2, kind: input, shape index: {}]
  %s3 = inlined_call_operand.vmem [shape: bf16[64,1024], index: 3, kind: input, shape index: {}]
  %s4 = inlined_call_operand.vmem [shape: f32[1,1024], index: 4, kind: input, shape index: {}]
  %s5 = inlined_call_operand.vmem [shape: bf16[1024,64], index: 5, kind: input, shape index: {}]
  %s6 = inlined_call_operand.vmem [shape: bf16[64,32], index: 6, kind: input, shape index: {}]
  %s7 = inlined_call_operand.vmem [shape: bf16[32,64], index: 7, kind: input, shape index: {}]
  %s8 = inlined_call_operand.hbm [shape: f32[16,128], index: 8, kind: output, shape index: {0}]
  %s9 = inlined_call_operand.hbm [shape: f32[1,1,128], index: 9, kind: output, shape index: {1}]
  %10 = xla_tuple %s8, %s9
  %s11 = sld [smem:[#allocation0]]
  $region50: #{tpu_custom_call.1} parent=0
    _
  %s13 = ssub.s32 1, %s11
  %s14 = scalar_select 0, %s13, %s11
  $region1: #{tpu_custom_call.1} parent=0
    #allocation2 [shape = 'u8[8192]{0}', space=vmem, size = 0x2000, scoped, tag = 'output window, operand 0, single buffered']
    #allocation3 [shape = 's32[1]{0}', space=sflag, size = 0x4, scoped, tag = 'scoped memory for tpu_custom_call.1']
    #allocation4 [shape = 'u8[512]{0}', space=vmem, size = 0x400, scoped, tag = 'output window, operand 1, single buffered']
    #allocation5 [shape = 's32[1]{0}', space=sflag, size = 0x4, scoped, tag = 'scoped memory for tpu_custom_call.1']
    %15 = vsyncpa [#allocation3], 0
    %16 = vsyncpa [#allocation5], 0
    // Predicated region
    $region2: #{tpu_custom_call.1} parent=1 // pred_check
      _
    $region3: #{tpu_custom_call.1} parent=1 // pred_check_branch
      %18 = sbr.rel (0) target = $region5
    $region4: #{tpu_custom_call.1} parent=1 // pred_region
      _
    $region5: #{tpu_custom_call.1} parent=1 // pred_fallthru
      _
    // Predicated region
    $region6: #{tpu_custom_call.1} parent=1 // pred_check
      _
    $region7: #{tpu_custom_call.1} parent=1 // pred_check_branch
      %20 = sbr.rel (0) target = $region9
    $region8: #{tpu_custom_call.1} parent=1 // pred_region
      _
    $region9: #{tpu_custom_call.1} parent=1 // pred_fallthru
      _
    // Predicated region
    $region10: #{tpu_custom_call.1} parent=1 // pred_check
      _
    $region11: #{tpu_custom_call.1} parent=1 // pred_check_branch
      %22 = sbr.rel (0) target = $region13
    $region12: #{tpu_custom_call.1} parent=1 // pred_region
      _
    $region13: #{tpu_custom_call.1} parent=1 // pred_fallthru
      _
    // Predicated region
    $region14: #{tpu_custom_call.1} parent=1 // pred_check
      _
    $region15: #{tpu_custom_call.1} parent=1 // pred_check_branch
      %24 = sbr.rel (0) target = $region17
    $region16: #{tpu_custom_call.1} parent=1 // pred_region
      _
    $region17: #{tpu_custom_call.1} parent=1 // pred_fallthru
      _
    // Predicated region
    $region18: #{tpu_custom_call.1} parent=1 // pred_check
      _
    $region19: #{tpu_custom_call.1} parent=1 // pred_check_branch
      %26 = sbr.rel (0) target = $region21
    $region20: #{tpu_custom_call.1} parent=1 // pred_region
      _
    $region21: #{tpu_custom_call.1} parent=1 // pred_fallthru
      _
    // Predicated region
    $region22: #{tpu_custom_call.1} parent=1 // pred_check
      _
    $region23: #{tpu_custom_call.1} parent=1 // pred_check_branch
      %28 = sbr.rel (0) target = $region25
    $region24: #{tpu_custom_call.1} parent=1 // pred_region
      _
    $region25: #{tpu_custom_call.1} parent=1 // pred_fallthru
      _
    // Predicated region
    $region26: #{tpu_custom_call.1} parent=1 // pred_check
      _
    $region27: #{tpu_custom_call.1} parent=1 // pred_check_branch
      %30 = sbr.rel (0) target = $region29
    $region28: #{tpu_custom_call.1} parent=1 // pred_region
      _
    $region29: #{tpu_custom_call.1} parent=1 // pred_fallthru
      _
    // Predicated region
    $region30: #{tpu_custom_call.1} parent=1 // pred_check
      _
    $region31: #{tpu_custom_call.1} parent=1 // pred_check_branch
      %32 = sbr.rel (0) target = $region33
    $region32: #{tpu_custom_call.1} parent=1 // pred_region
      _
    $region33: #{tpu_custom_call.1} parent=1 // pred_fallthru
      _
    %v34 = vld [vmem:[%s0] sm:$0xf]
    %v35 = vld [vmem:[%s0 + $0x4] sm:$0xf]
    %v36 = vld [vmem:[%s3] sm:$0xff]
    %v37 = vld [vmem:[%s3 + $0x8] sm:$0xff]
    %v38 = vld [vmem:[%s3 + $0x10] sm:$0xff]
    %v39 = vld [vmem:[%s3 + $0x18] sm:$0xff]
    %v40 = vld [vmem:[%s3 + $0x20] sm:$0xff]
    %v41 = vld [vmem:[%s3 + $0x28] sm:$0xff]
    %v42 = vld [vmem:[%s3 + $0x30] sm:$0xff]
    %v43 = vld [vmem:[%s3 + $0x38] sm:$0xff]
    %v44 = vld [vmem:[%s3 + $0x40] sm:$0xff]
    %v45 = vld [vmem:[%s3 + $0x48] sm:$0xff]
    %v46 = vld [vmem:[%s3 + $0x50] sm:$0xff]
    %v47 = vld [vmem:[%s3 + $0x58] sm:$0xff]
    %v48 = vld [vmem:[%s3 + $0x60] sm:$0xff]
    %v49 = vld [vmem:[%s3 + $0x68] sm:$0xff]
    %v50 = vld [vmem:[%s3 + $0x70] sm:$0xff]
    %v51 = vld [vmem:[%s3 + $0x78] sm:$0xff]
    %v52 = vld [vmem:[%s3 + $0x80] sm:$0xff]
    %v53 = vld [vmem:[%s3 + $0x88] sm:$0xff]
    %v54 = vld [vmem:[%s3 + $0x90] sm:$0xff]
    %v55 = vld [vmem:[%s3 + $0x98] sm:$0xff]
    %v56 = vld [vmem:[%s3 + $0xa0] sm:$0xff]
    %v57 = vld [vmem:[%s3 + $0xa8] sm:$0xff]
    %v58 = vld [vmem:[%s3 + $0xb0] sm:$0xff]
    %v59 = vld [vmem:[%s3 + $0xb8] sm:$0xff]
    %v60 = vld [vmem:[%s3 + $0xc0] sm:$0xff]
    %v61 = vld [vmem:[%s3 + $0xc8] sm:$0xff]
    %v62 = vld [vmem:[%s3 + $0xd0] sm:$0xff]
    %v63 = vld [vmem:[%s3 + $0xd8] sm:$0xff]
    %v64 = vld [vmem:[%s3 + $0xe0] sm:$0xff]
    %v65 = vld [vmem:[%s3 + $0xe8] sm:$0xff]
    %v66 = vld [vmem:[%s3 + $0xf0] sm:$0xff]
    %v67 = vld [vmem:[%s3 + $0xf8] sm:$0xff]
    %v68 = vld [vmem:[%s4] sm:$0xff]
    %v70 = vlaneseq
    %v71 = vshrl.u32 %v70, 7
    %v72 = vsub.s32 0, %v71
    %v73 = vrot.slane %v68, %v72
    %v74 = vlaneseq
    %v75 = vshrl.u32 %v74, 7
    %v76 = vsub.s32 1, %v75
    %v77 = vrot.slane %v68, %v76
    %v78 = vlaneseq
    %v79 = vshrl.u32 %v78, 7
    %v80 = vsub.s32 2, %v79
    %v81 = vrot.slane %v68, %v80
    %v82 = vlaneseq
    %v83 = vshrl.u32 %v82, 7
    %v84 = vsub.s32 3, %v83
    %v85 = vrot.slane %v68, %v84
    %v86 = vlaneseq
    %v87 = vshrl.u32 %v86, 7
    %v88 = vsub.s32 4, %v87
    %v89 = vrot.slane %v68, %v88
    %v90 = vlaneseq
    %v91 = vshrl.u32 %v90, 7
    %v92 = vsub.s32 5, %v91
    %v93 = vrot.slane %v68, %v92
    %v94 = vlaneseq
    %v95 = vshrl.u32 %v94, 7
    %v96 = vsub.s32 6, %v95
    %v97 = vrot.slane %v68, %v96
    %v98 = vlaneseq
    %v99 = vshrl.u32 %v98, 7
    %v100 = vsub.s32 7, %v99
    %v101 = vrot.slane %v68, %v100
    %v112 = vunpack.c.l.b16 %v34
    %v113 = vunpack.c.l.b16 %v35
    %v114 = vpack.c.b16 %v113, %v112
    %v147 = vunpack.c.l.b16 %v36
    %v148 = vunpack.c.h.b16 %v36
    %v149 = vunpack.c.l.b16 %v37
    %v150 = vunpack.c.h.b16 %v37
    %v151 = vunpack.c.l.b16 %v38
    %v152 = vunpack.c.h.b16 %v38
    %v153 = vunpack.c.l.b16 %v39
    %v154 = vunpack.c.h.b16 %v39
    %v155 = vunpack.c.l.b16 %v40
    %v156 = vunpack.c.h.b16 %v40
    %v157 = vunpack.c.l.b16 %v41
    %v158 = vunpack.c.h.b16 %v41
    %v159 = vunpack.c.l.b16 %v42
    %v160 = vunpack.c.h.b16 %v42
    %v161 = vunpack.c.l.b16 %v43
    %v162 = vunpack.c.h.b16 %v43
    %v163 = vunpack.c.l.b16 %v44
    %v164 = vunpack.c.h.b16 %v44
    %v165 = vunpack.c.l.b16 %v45
    %v166 = vunpack.c.h.b16 %v45
    %v167 = vunpack.c.l.b16 %v46
    %v168 = vunpack.c.h.b16 %v46
    %v169 = vunpack.c.l.b16 %v47
    %v170 = vunpack.c.h.b16 %v47
    %v171 = vunpack.c.l.b16 %v48
    %v172 = vunpack.c.h.b16 %v48
    %v173 = vunpack.c.l.b16 %v49
    %v174 = vunpack.c.h.b16 %v49
    %v175 = vunpack.c.l.b16 %v50
    %v176 = vunpack.c.h.b16 %v50
    %v177 = vunpack.c.l.b16 %v51
    %v178 = vunpack.c.h.b16 %v51
    %v179 = vunpack.c.l.b16 %v52
    %v180 = vunpack.c.h.b16 %v52
    %v181 = vunpack.c.l.b16 %v53
    %v182 = vunpack.c.h.b16 %v53
    %v183 = vunpack.c.l.b16 %v54
    %v184 = vunpack.c.h.b16 %v54
    %v185 = vunpack.c.l.b16 %v55
    %v186 = vunpack.c.h.b16 %v55
    %v187 = vunpack.c.l.b16 %v56
    %v188 = vunpack.c.h.b16 %v56
    %v189 = vunpack.c.l.b16 %v57
    %v190 = vunpack.c.h.b16 %v57
    %v191 = vunpack.c.l.b16 %v58
    %v192 = vunpack.c.h.b16 %v58
    %v193 = vunpack.c.l.b16 %v59
    %v194 = vunpack.c.h.b16 %v59
    %v195 = vunpack.c.l.b16 %v60
    %v196 = vunpack.c.h.b16 %v60
    %v197 = vunpack.c.l.b16 %v61
    %v198 = vunpack.c.h.b16 %v61
    %v199 = vunpack.c.l.b16 %v62
    %v200 = vunpack.c.h.b16 %v62
    %v201 = vunpack.c.l.b16 %v63
    %v202 = vunpack.c.h.b16 %v63
    %v203 = vunpack.c.l.b16 %v64
    %v204 = vunpack.c.h.b16 %v64
    %v205 = vunpack.c.l.b16 %v65
    %v206 = vunpack.c.h.b16 %v65
    %v207 = vunpack.c.l.b16 %v66
    %v208 = vunpack.c.h.b16 %v66
    %v209 = vunpack.c.l.b16 %v67
    %v210 = vunpack.c.h.b16 %v67
    %v211 = vpack.c.b16 %v155, %v147
    %v212 = vpack.c.b16 %v156, %v148
    %v213 = vpack.c.b16 %v157, %v149
    %v214 = vpack.c.b16 %v158, %v150
    %v215 = vpack.c.b16 %v159, %v151
    %v216 = vpack.c.b16 %v160, %v152
    %v217 = vpack.c.b16 %v161, %v153
    %v218 = vpack.c.b16 %v162, %v154
    %v219 = vpack.c.b16 %v171, %v163
    %v220 = vpack.c.b16 %v172, %v164
    %v221 = vpack.c.b16 %v173, %v165
    %v222 = vpack.c.b16 %v174, %v166
    %v223 = vpack.c.b16 %v175, %v167
    %v224 = vpack.c.b16 %v176, %v168
    %v225 = vpack.c.b16 %v177, %v169
    %v226 = vpack.c.b16 %v178, %v170
    %v227 = vpack.c.b16 %v187, %v179
    %v228 = vpack.c.b16 %v188, %v180
    %v229 = vpack.c.b16 %v189, %v181
    %v230 = vpack.c.b16 %v190, %v182
    %v231 = vpack.c.b16 %v191, %v183
    %v232 = vpack.c.b16 %v192, %v184
    %v233 = vpack.c.b16 %v193, %v185
    %v234 = vpack.c.b16 %v194, %v186
    %v235 = vpack.c.b16 %v203, %v195
    %v236 = vpack.c.b16 %v204, %v196
    %v237 = vpack.c.b16 %v205, %v197
    %v238 = vpack.c.b16 %v206, %v198
    %v239 = vpack.c.b16 %v207, %v199
    %v240 = vpack.c.b16 %v208, %v200
    %v241 = vpack.c.b16 %v209, %v201
    %v242 = vpack.c.b16 %v210, %v202
    %vm275 = vcmask 523264
    %v277 = vsel %vm275, %v114, 0
    %279 = vmatprep.subr.bf16.mxu0 %v212
    %280 = vmatpush1.bf16.msra.mxu0 %v211
    %281 = vmatprep.subr.bf16.mxu0 %v220
    %282 = vmatpush1.bf16.msra.mxu0 %v219
    %283 = vmatprep.subr.bf16.mxu0 %v228
    %284 = vmatpush1.bf16.msra.mxu0 %v227
    %285 = vmatprep.subr.bf16.mxu0 %v236
    %286 = vmatpush1.bf16.msra.mxu0 %v235
    %287 = vmatprep.subr.bf16.mxu0 0
    %288 = vmatpush1.bf16.msra.mxu0 0
    %289 = vmatprep.subr.bf16.mxu0 0
    %290 = vmatpush1.bf16.msra.mxu0 0
    %291 = vmatprep.subr.bf16.mxu0 0
    %292 = vmatpush1.bf16.msra.mxu0 0
    %293 = vmatprep.subr.bf16.mxu0 0
    %294 = vmatpush1.bf16.msra.mxu0 0
    %295 = vmatprep.subr.bf16.mxu0 0
    %296 = vmatpush1.bf16.msra.mxu0 0
    %297 = vmatprep.subr.bf16.mxu0 0
    %298 = vmatpush1.bf16.msra.mxu0 0
    %299 = vmatprep.subr.bf16.mxu0 0
    %300 = vmatpush1.bf16.msra.mxu0 0
    %301 = vmatprep.subr.bf16.mxu0 0
    %302 = vmatpush1.bf16.msra.mxu0 0
    %303 = vmatprep.subr.bf16.mxu0 0
    %304 = vmatpush1.bf16.msra.mxu0 0
    %305 = vmatprep.subr.bf16.mxu0 0
    %306 = vmatpush1.bf16.msra.mxu0 0
    %307 = vmatprep.subr.bf16.mxu0 0
    %308 = vmatpush1.bf16.msra.mxu0 0
    %309 = vmatprep.subr.bf16.mxu0 0
    %310 = vmatpush1.bf16.msra.mxu0 0
    %311 = vmatprep.mubr.bf16.mxu0 0
    %312 = vmatmul.mubr.bf16.gmra.mrb[0].mxu0 %v277
    %v313 = vpop.f32.mrb[0].mxu0
    %v314 = vadd.f32 %v73, %v313
    %v315 = vpop.f32.mrb[0].mxu0
    %v316 = vadd.f32 %v77, %v315
    %v317 = vpop.f32.mrb[0].mxu0
    %v318 = vadd.f32 %v73, %v317
    %v319 = vpop.f32.mrb[0].mxu0
    %v320 = vadd.f32 %v77, %v319
    %321 = vdwg.mxu0
    %322 = vmatprep.subr.bf16.mxu0 %v214
    %323 = vmatpush1.bf16.msra.mxu0 %v213
    %324 = vmatprep.subr.bf16.mxu0 %v222
    %325 = vmatpush1.bf16.msra.mxu0 %v221
    %326 = vmatprep.subr.bf16.mxu0 %v230
    %327 = vmatpush1.bf16.msra.mxu0 %v229
    %328 = vmatprep.subr.bf16.mxu0 %v238
    %329 = vmatpush1.bf16.msra.mxu0 %v237
    %330 = vmatprep.subr.bf16.mxu0 0
    %331 = vmatpush1.bf16.msra.mxu0 0
    %332 = vmatprep.subr.bf16.mxu0 0
    %333 = vmatpush1.bf16.msra.mxu0 0
    %334 = vmatprep.subr.bf16.mxu0 0
    %335 = vmatpush1.bf16.msra.mxu0 0
    %336 = vmatprep.subr.bf16.mxu0 0
    %337 = vmatpush1.bf16.msra.mxu0 0
    %338 = vmatprep.subr.bf16.mxu0 0
    %339 = vmatpush1.bf16.msra.mxu0 0
    %340 = vmatprep.subr.bf16.mxu0 0
    %341 = vmatpush1.bf16.msra.mxu0 0
    %342 = vmatprep.subr.bf16.mxu0 0
    %343 = vmatpush1.bf16.msra.mxu0 0
    %344 = vmatprep.subr.bf16.mxu0 0
    %345 = vmatpush1.bf16.msra.mxu0 0
    %346 = vmatprep.subr.bf16.mxu0 0
    %347 = vmatpush1.bf16.msra.mxu0 0
    %348 = vmatprep.subr.bf16.mxu0 0
    %349 = vmatpush1.bf16.msra.mxu0 0
    %350 = vmatprep.subr.bf16.mxu0 0
    %351 = vmatpush1.bf16.msra.mxu0 0
    %352 = vmatprep.subr.bf16.mxu0 0
    %353 = vmatpush1.bf16.msra.mxu0 0
    %354 = vmatprep.mubr.bf16.mxu0 0
    %355 = vmatmul.mubr.bf16.gmra.mrb[0].mxu0 %v277
    %v356 = vpop.f32.mrb[0].mxu0
    %v357 = vadd.f32 %v81, %v356
    %v358 = vpop.f32.mrb[0].mxu0
    %v359 = vadd.f32 %v85, %v358
    %v360 = vpop.f32.mrb[0].mxu0
    %v361 = vadd.f32 %v81, %v360
    %v362 = vpop.f32.mrb[0].mxu0
    %v363 = vadd.f32 %v85, %v362
    %364 = vdwg.mxu0
    %365 = vmatprep.subr.bf16.mxu0 %v216
    %366 = vmatpush1.bf16.msra.mxu0 %v215
    %367 = vmatprep.subr.bf16.mxu0 %v224
    %368 = vmatpush1.bf16.msra.mxu0 %v223
    %369 = vmatprep.subr.bf16.mxu0 %v232
    %370 = vmatpush1.bf16.msra.mxu0 %v231
    %371 = vmatprep.subr.bf16.mxu0 %v240
    %372 = vmatpush1.bf16.msra.mxu0 %v239
    %373 = vmatprep.subr.bf16.mxu0 0
    %374 = vmatpush1.bf16.msra.mxu0 0
    %375 = vmatprep.subr.bf16.mxu0 0
    %376 = vmatpush1.bf16.msra.mxu0 0
    %377 = vmatprep.subr.bf16.mxu0 0
    %378 = vmatpush1.bf16.msra.mxu0 0
    %379 = vmatprep.subr.bf16.mxu0 0
    %380 = vmatpush1.bf16.msra.mxu0 0
    %381 = vmatprep.subr.bf16.mxu0 0
    %382 = vmatpush1.bf16.msra.mxu0 0
    %383 = vmatprep.subr.bf16.mxu0 0
    %384 = vmatpush1.bf16.msra.mxu0 0
    %385 = vmatprep.subr.bf16.mxu0 0
    %386 = vmatpush1.bf16.msra.mxu0 0
    %387 = vmatprep.subr.bf16.mxu0 0
    %388 = vmatpush1.bf16.msra.mxu0 0
    %389 = vmatprep.subr.bf16.mxu0 0
    %390 = vmatpush1.bf16.msra.mxu0 0
    %391 = vmatprep.subr.bf16.mxu0 0
    %392 = vmatpush1.bf16.msra.mxu0 0
    %393 = vmatprep.subr.bf16.mxu0 0
    %394 = vmatpush1.bf16.msra.mxu0 0
    %395 = vmatprep.subr.bf16.mxu0 0
    %396 = vmatpush1.bf16.msra.mxu0 0
    %397 = vmatprep.mubr.bf16.mxu0 0
    %398 = vmatmul.mubr.bf16.gmra.mrb[0].mxu0 %v277
    %v399 = vpop.f32.mrb[0].mxu0
    %v400 = vadd.f32 %v89, %v399
    %v401 = vpop.f32.mrb[0].mxu0
    %v402 = vadd.f32 %v93, %v401
    %v403 = vpop.f32.mrb[0].mxu0
    %v404 = vadd.f32 %v89, %v403
    %v405 = vpop.f32.mrb[0].mxu0
    %v406 = vadd.f32 %v93, %v405
    %407 = vdwg.mxu0
    %408 = vmatprep.subr.bf16.mxu0 %v218
    %409 = vmatpush1.bf16.msra.mxu0 %v217
    %410 = vmatprep.subr.bf16.mxu0 %v226
    %411 = vmatpush1.bf16.msra.mxu0 %v225
    %412 = vmatprep.subr.bf16.mxu0 %v234
    %413 = vmatpush1.bf16.msra.mxu0 %v233
    %414 = vmatprep.subr.bf16.mxu0 %v242
    %415 = vmatpush1.bf16.msra.mxu0 %v241
    %416 = vmatprep.subr.bf16.mxu0 0
    %417 = vmatpush1.bf16.msra.mxu0 0
    %418 = vmatprep.subr.bf16.mxu0 0
    %419 = vmatpush1.bf16.msra.mxu0 0
    %420 = vmatprep.subr.bf16.mxu0 0
    %421 = vmatpush1.bf16.msra.mxu0 0
    %422 = vmatprep.subr.bf16.mxu0 0
    %423 = vmatpush1.bf16.msra.mxu0 0
    %424 = vmatprep.subr.bf16.mxu0 0
    %425 = vmatpush1.bf16.msra.mxu0 0
    %426 = vmatprep.subr.bf16.mxu0 0
    %427 = vmatpush1.bf16.msra.mxu0 0
    %428 = vmatprep.subr.bf16.mxu0 0
    %429 = vmatpush1.bf16.msra.mxu0 0
    %430 = vmatprep.subr.bf16.mxu0 0
    %431 = vmatpush1.bf16.msra.mxu0 0
    %432 = vmatprep.subr.bf16.mxu0 0
    %433 = vmatpush1.bf16.msra.mxu0 0
    %434 = vmatprep.subr.bf16.mxu0 0
    %435 = vmatpush1.bf16.msra.mxu0 0
    %436 = vmatprep.subr.bf16.mxu0 0
    %437 = vmatpush1.bf16.msra.mxu0 0
    %438 = vmatprep.subr.bf16.mxu0 0
    %439 = vmatpush1.bf16.msra.mxu0 0
    %440 = vmatprep.mubr.bf16.mxu0 0
    %441 = vmatmul.mubr.bf16.gmra.mrb[0].mxu0 %v277
    %v442 = vpop.f32.mrb[0].mxu0
    %v443 = vadd.f32 %v97, %v442
    %v444 = vpop.f32.mrb[0].mxu0
    %v445 = vadd.f32 %v101, %v444
    %v446 = vpop.f32.mrb[0].mxu0
    %v447 = vadd.f32 %v97, %v446
    %v448 = vpop.f32.mrb[0].mxu0
    %v449 = vadd.f32 %v101, %v448
    %450 = vdwg.mxu0
    %v451 = vmax.f32 %v314, %v357
    %v452 = vmax.f32 %v316, %v359
    %v453 = vmax.f32 %v451, %v400
    %v454 = vmax.f32 %v452, %v402
    %v455 = vmax.f32 %v453, %v443
    %v456 = vmax.f32 %v454, %v445
    %v457 = vmax.f32 %v455, %v456
    %458 = vmax.xlane.f32.xlu0 %v457
    %v459 = vpop.xlane.xlu0 %458
    %v460 = vmax.f32 %v318, %v361
    %v461 = vmax.f32 %v320, %v363
    %v462 = vmax.f32 %v460, %v404
    %v463 = vmax.f32 %v461, %v406
    %v464 = vmax.f32 %v462, %v447
    %v465 = vmax.f32 %v463, %v449
    %v466 = vmax.f32 %v464, %v465
    %467 = vmax.xlane.f32.xlu0 %v466
    %v468 = vpop.xlane.xlu0 %467
    %v469 = vsub.f32 %v314, %v459
    %v470 = vsub.f32 %v316, %v459
    %v471 = vsub.f32 %v357, %v459
    %v472 = vsub.f32 %v359, %v459
    %v473 = vsub.f32 %v400, %v459
    %v474 = vsub.f32 %v402, %v459
    %v475 = vsub.f32 %v443, %v459
    %v476 = vsub.f32 %v445, %v459
    %v477 = vsub.f32 %v318, %v468
    %v478 = vsub.f32 %v320, %v468
    %v479 = vsub.f32 %v361, %v468
    %v480 = vsub.f32 %v363, %v468
    %v481 = vsub.f32 %v404, %v468
    %v482 = vsub.f32 %v406, %v468
    %v483 = vsub.f32 %v447, %v468
    %v484 = vsub.f32 %v449, %v468
    %v485 = vmul.f32 %v469, 1.442695
    %v486 = vpow.pop %v485
    %v487 = vmul.f32 %v470, 1.442695
    %v488 = vpow.pop %v487
    %v489 = vmul.f32 %v471, 1.442695
    %v490 = vpow.pop %v489
    %v491 = vmul.f32 %v472, 1.442695
    %v492 = vpow.pop %v491
    %v493 = vmul.f32 %v473, 1.442695
    %v494 = vpow.pop %v493
    %v495 = vmul.f32 %v474, 1.442695
    %v496 = vpow.pop %v495
    %v497 = vmul.f32 %v475, 1.442695
    %v498 = vpow.pop %v497
    %v499 = vmul.f32 %v476, 1.442695
    %v500 = vpow.pop %v499
    %v501 = vmul.f32 %v477, 1.442695
    %v502 = vpow.pop %v501
    %v503 = vmul.f32 %v478, 1.442695
    %v504 = vpow.pop %v503
    %v505 = vmul.f32 %v479, 1.442695
    %v506 = vpow.pop %v505
    %v507 = vmul.f32 %v480, 1.442695
    %v508 = vpow.pop %v507
    %v509 = vmul.f32 %v481, 1.442695
    %v510 = vpow.pop %v509
    %v511 = vmul.f32 %v482, 1.442695
    %v512 = vpow.pop %v511
    %v513 = vmul.f32 %v483, 1.442695
    %v514 = vpow.pop %v513
    %v515 = vmul.f32 %v484, 1.442695
    %v516 = vpow.pop %v515
    %v517 = vadd.f32 %v486, %v488
    %v518 = vadd.f32 %v517, %v490
    %v519 = vadd.f32 %v518, %v492
    %v520 = vadd.f32 %v519, %v494
    %v521 = vadd.f32 %v520, %v496
    %v522 = vadd.f32 %v521, %v498
    %v523 = vadd.f32 %v522, %v500
    %524 = vadd.xlane.f32.xlu0 %v523
    %v525 = vpop.xlane.xlu0 %524
    %v526 = vadd.f32 %v502, %v504
    %v527 = vadd.f32 %v526, %v506
    %v528 = vadd.f32 %v527, %v508
    %v529 = vadd.f32 %v528, %v510
    %v530 = vadd.f32 %v529, %v512
    %v531 = vadd.f32 %v530, %v514
    %v532 = vadd.f32 %v531, %v516
    %533 = vadd.xlane.f32.xlu0 %v532
    %v534 = vpop.xlane.xlu0 %533
    %v535 = vlog2.pop %v525
    %v536 = vmul.f32 %v535, 0.6931472
    %v537 = vlog2.pop %v534
    %v538 = vmul.f32 %v537, 0.6931472
    %v539 = vsub.f32 %v469, %v536
    %v540 = vsub.f32 %v470, %v536
    %v541 = vsub.f32 %v471, %v536
    %v542 = vsub.f32 %v472, %v536
    %v543 = vsub.f32 %v473, %v536
    %v544 = vsub.f32 %v474, %v536
    %v545 = vsub.f32 %v475, %v536
    %v546 = vsub.f32 %v476, %v536
    %v547 = vsub.f32 %v477, %v538
    %v548 = vsub.f32 %v478, %v538
    %v549 = vsub.f32 %v479, %v538
    %v550 = vsub.f32 %v480, %v538
    %v551 = vsub.f32 %v481, %v538
    %v552 = vsub.f32 %v482, %v538
    %v553 = vsub.f32 %v483, %v538
    %v554 = vsub.f32 %v484, %v538
    %v555 = vrcp.pop %v525
    %v556 = vmul.f32 1.0, %v555
    %v557 = vrcp.pop %v534
    %v558 = vmul.f32 1.0, %v557
    %v559 = vmul.f32 %v486, %v556
    %v560 = vmul.f32 %v488, %v556
    %v561 = vmul.f32 %v490, %v556
    %v562 = vmul.f32 %v492, %v556
    %v563 = vmul.f32 %v494, %v556
    %v564 = vmul.f32 %v496, %v556
    %v565 = vmul.f32 %v498, %v556
    %v566 = vmul.f32 %v500, %v556
    %v567 = vmul.f32 %v502, %v558
    %v568 = vmul.f32 %v504, %v558
    %v569 = vmul.f32 %v506, %v558
    %v570 = vmul.f32 %v508, %v558
    %v571 = vmul.f32 %v510, %v558
    %v572 = vmul.f32 %v512, %v558
    %v573 = vmul.f32 %v514, %v558
    %v574 = vmul.f32 %v516, %v558
    %v575 = vmul.f32 %v559, %v539
    %v576 = vmul.f32 %v560, %v540
    %v577 = vmul.f32 %v561, %v541
    %v578 = vmul.f32 %v562, %v542
    %v579 = vmul.f32 %v563, %v543
    %v580 = vmul.f32 %v564, %v544
    %v581 = vmul.f32 %v565, %v545
    %v582 = vmul.f32 %v566, %v546
    %v583 = vmul.f32 %v567, %v547
    %v584 = vmul.f32 %v568, %v548
    %v585 = vmul.f32 %v569, %v549
    %v586 = vmul.f32 %v570, %v550
    %v587 = vmul.f32 %v571, %v551
    %v588 = vmul.f32 %v572, %v552
    %v589 = vmul.f32 %v573, %v553
    %v590 = vmul.f32 %v574, %v554
    %v591 = vadd.f32 %v575, %v576
    %v592 = vadd.f32 %v591, %v577
    %v593 = vadd.f32 %v592, %v578
    %v594 = vadd.f32 %v593, %v579
    %v595 = vadd.f32 %v594, %v580
    %v596 = vadd.f32 %v595, %v581
    %v597 = vadd.f32 %v596, %v582
    %v598 = vadd.f32 %v597, %v583
    %v599 = vadd.f32 %v598, %v584
    %v600 = vadd.f32 %v599, %v585
    %v601 = vadd.f32 %v600, %v586
    %v602 = vadd.f32 %v601, %v587
    %v603 = vadd.f32 %v602, %v588
    %v604 = vadd.f32 %v603, %v589
    %v605 = vadd.f32 %v604, %v590
    %606 = vadd.xlane.f32.xlu0 %v605
    %v607 = vpop.xlane.xlu0 %606
    %v608 = vrot.slane %v607, 4
    %v609 = vadd.f32 %v607, %v608
    %v610 = vrot.slane %v609, 2
    %v611 = vadd.f32 %v609, %v610
    %v612 = vrot.slane %v611, 1
    %v613 = vadd.f32 %v611, %v612
    %s614 = vtos %v613
    %v615 = vld [vmem:[%s1] sm:$0xff]
    %v616 = vld [vmem:[%s1 + $0x8] sm:$0xff]
    %v617 = vld [vmem:[%s1 + $0x10] sm:$0xff]
    %v618 = vld [vmem:[%s1 + $0x18] sm:$0xff]
    %v619 = vld [vmem:[%s1 + $0x20] sm:$0xff]
    %v620 = vld [vmem:[%s1 + $0x28] sm:$0xff]
    %v621 = vld [vmem:[%s1 + $0x30] sm:$0xff]
    %v622 = vld [vmem:[%s1 + $0x38] sm:$0xff]
    %v623 = vld [vmem:[%s1 + $0x40] sm:$0xff]
    %v624 = vld [vmem:[%s1 + $0x48] sm:$0xff]
    %v625 = vld [vmem:[%s1 + $0x50] sm:$0xff]
    %v626 = vld [vmem:[%s1 + $0x58] sm:$0xff]
    %v627 = vld [vmem:[%s1 + $0x60] sm:$0xff]
    %v628 = vld [vmem:[%s1 + $0x68] sm:$0xff]
    %v629 = vld [vmem:[%s1 + $0x70] sm:$0xff]
    %v630 = vld [vmem:[%s1 + $0x78] sm:$0xff]
    %v631 = vadd.f32 %v615, 1e-20
    %v632 = vadd.f32 %v616, 1e-20
    %v633 = vadd.f32 %v617, 1e-20
    %v634 = vadd.f32 %v618, 1e-20
    %v635 = vadd.f32 %v619, 1e-20
    %v636 = vadd.f32 %v620, 1e-20
    %v637 = vadd.f32 %v621, 1e-20
    %v638 = vadd.f32 %v622, 1e-20
    %v639 = vadd.f32 %v623, 1e-20
    %v640 = vadd.f32 %v624, 1e-20
    %v641 = vadd.f32 %v625, 1e-20
    %v642 = vadd.f32 %v626, 1e-20
    %v643 = vadd.f32 %v627, 1e-20
    %v644 = vadd.f32 %v628, 1e-20
    %v645 = vadd.f32 %v629, 1e-20
    %v646 = vadd.f32 %v630, 1e-20
    %v647 = vlog2.pop %v631
    %v648 = vmul.f32 %v647, 0.6931472
    %v649 = vlog2.pop %v632
    %v650 = vmul.f32 %v649, 0.6931472
    %v651 = vlog2.pop %v633
    %v652 = vmul.f32 %v651, 0.6931472
    %v653 = vlog2.pop %v634
    %v654 = vmul.f32 %v653, 0.6931472
    %v655 = vlog2.pop %v635
    %v656 = vmul.f32 %v655, 0.6931472
    %v657 = vlog2.pop %v636
    %v658 = vmul.f32 %v657, 0.6931472
    %v659 = vlog2.pop %v637
    %v660 = vmul.f32 %v659, 0.6931472
    %v661 = vlog2.pop %v638
    %v662 = vmul.f32 %v661, 0.6931472
    %v663 = vlog2.pop %v639
    %v664 = vmul.f32 %v663, 0.6931472
    %v665 = vlog2.pop %v640
    %v666 = vmul.f32 %v665, 0.6931472
    %v667 = vlog2.pop %v641
    %v668 = vmul.f32 %v667, 0.6931472
    %v669 = vlog2.pop %v642
    %v670 = vmul.f32 %v669, 0.6931472
    %v671 = vlog2.pop %v643
    %v672 = vmul.f32 %v671, 0.6931472
    %v673 = vlog2.pop %v644
    %v674 = vmul.f32 %v673, 0.6931472
    %v675 = vlog2.pop %v645
    %v676 = vmul.f32 %v675, 0.6931472
    %v677 = vlog2.pop %v646
    %v678 = vmul.f32 %v677, 0.6931472
    %v679 = vsub.f32 0.0, %v648
    %v680 = vsub.f32 0.0, %v650
    %v681 = vsub.f32 0.0, %v652
    %v682 = vsub.f32 0.0, %v654
    %v683 = vsub.f32 0.0, %v656
    %v684 = vsub.f32 0.0, %v658
    %v685 = vsub.f32 0.0, %v660
    %v686 = vsub.f32 0.0, %v662
    %v687 = vsub.f32 0.0, %v664
    %v688 = vsub.f32 0.0, %v666
    %v689 = vsub.f32 0.0, %v668
    %v690 = vsub.f32 0.0, %v670
    %v691 = vsub.f32 0.0, %v672
    %v692 = vsub.f32 0.0, %v674
    %v693 = vsub.f32 0.0, %v676
    %v694 = vsub.f32 0.0, %v678
    %v695 = vadd.f32 %v679, 1e-20
    %v696 = vadd.f32 %v680, 1e-20
    %v697 = vadd.f32 %v681, 1e-20
    %v698 = vadd.f32 %v682, 1e-20
    %v699 = vadd.f32 %v683, 1e-20
    %v700 = vadd.f32 %v684, 1e-20
    %v701 = vadd.f32 %v685, 1e-20
    %v702 = vadd.f32 %v686, 1e-20
    %v703 = vadd.f32 %v687, 1e-20
    %v704 = vadd.f32 %v688, 1e-20
    %v705 = vadd.f32 %v689, 1e-20
    %v706 = vadd.f32 %v690, 1e-20
    %v707 = vadd.f32 %v691, 1e-20
    %v708 = vadd.f32 %v692, 1e-20
    %v709 = vadd.f32 %v693, 1e-20
    %v710 = vadd.f32 %v694, 1e-20
    %v711 = vrcp.pop %v695
    %v712 = vmul.f32 %v486, %v711
    %v713 = vrcp.pop %v696
    %v714 = vmul.f32 %v488, %v713
    %v715 = vrcp.pop %v697
    %v716 = vmul.f32 %v490, %v715
    %v717 = vrcp.pop %v698
    %v718 = vmul.f32 %v492, %v717
    %v719 = vrcp.pop %v699
    %v720 = vmul.f32 %v494, %v719
    %v721 = vrcp.pop %v700
    %v722 = vmul.f32 %v496, %v721
    %v723 = vrcp.pop %v701
    %v724 = vmul.f32 %v498, %v723
    %v725 = vrcp.pop %v702
    %v726 = vmul.f32 %v500, %v725
    %v727 = vrcp.pop %v703
    %v728 = vmul.f32 %v502, %v727
    %v729 = vrcp.pop %v704
    %v730 = vmul.f32 %v504, %v729
    %v731 = vrcp.pop %v705
    %v732 = vmul.f32 %v506, %v731
    %v733 = vrcp.pop %v706
    %v734 = vmul.f32 %v508, %v733
    %v735 = vrcp.pop %v707
    %v736 = vmul.f32 %v510, %v735
    %v737 = vrcp.pop %v708
    %v738 = vmul.f32 %v512, %v737
    %v739 = vrcp.pop %v709
    %v740 = vmul.f32 %v514, %v739
    %v741 = vrcp.pop %v710
    %v742 = vmul.f32 %v516, %v741
    %v743 = vrsqrt.pop %v712
    %v744 = vmul.f32 %v712, %v743
    %vm745 = vcmp.eq.f32.partialorder %v712, inf
    %v746 = vsel %vm745, %v712, %v744
    %vm747 = vcmp.eq.f32.partialorder %v712, 0.0
    %v748 = vand.u32 %v712, 2147483648
    %v749 = vsel %vm747, %v748, %v746
    %v750 = vrsqrt.pop %v714
    %v751 = vmul.f32 %v714, %v750
    %vm752 = vcmp.eq.f32.partialorder %v714, inf
    %v753 = vsel %vm752, %v714, %v751
    %vm754 = vcmp.eq.f32.partialorder %v714, 0.0
    %v755 = vand.u32 %v714, 2147483648
    %v756 = vsel %vm754, %v755, %v753
    %v757 = vrsqrt.pop %v716
    %v758 = vmul.f32 %v716, %v757
    %vm759 = vcmp.eq.f32.partialorder %v716, inf
    %v760 = vsel %vm759, %v716, %v758
    %vm761 = vcmp.eq.f32.partialorder %v716, 0.0
    %v762 = vand.u32 %v716, 2147483648
    %v763 = vsel %vm761, %v762, %v760
    %v764 = vrsqrt.pop %v718
    %v765 = vmul.f32 %v718, %v764
    %vm766 = vcmp.eq.f32.partialorder %v718, inf
    %v767 = vsel %vm766, %v718, %v765
    %vm768 = vcmp.eq.f32.partialorder %v718, 0.0
    %v769 = vand.u32 %v718, 2147483648
    %v770 = vsel %vm768, %v769, %v767
    %v771 = vrsqrt.pop %v720
    %v772 = vmul.f32 %v720, %v771
    %vm773 = vcmp.eq.f32.partialorder %v720, inf
    %v774 = vsel %vm773, %v720, %v772
    %vm775 = vcmp.eq.f32.partialorder %v720, 0.0
    %v776 = vand.u32 %v720, 2147483648
    %v777 = vsel %vm775, %v776, %v774
    %v778 = vrsqrt.pop %v722
    %v779 = vmul.f32 %v722, %v778
    %vm780 = vcmp.eq.f32.partialorder %v722, inf
    %v781 = vsel %vm780, %v722, %v779
    %vm782 = vcmp.eq.f32.partialorder %v722, 0.0
    %v783 = vand.u32 %v722, 2147483648
    %v784 = vsel %vm782, %v783, %v781
    %v785 = vrsqrt.pop %v724
    %v786 = vmul.f32 %v724, %v785
    %vm787 = vcmp.eq.f32.partialorder %v724, inf
    %v788 = vsel %vm787, %v724, %v786
    %vm789 = vcmp.eq.f32.partialorder %v724, 0.0
    %v790 = vand.u32 %v724, 2147483648
    %v791 = vsel %vm789, %v790, %v788
    %v792 = vrsqrt.pop %v726
    %v793 = vmul.f32 %v726, %v792
    %vm794 = vcmp.eq.f32.partialorder %v726, inf
    %v795 = vsel %vm794, %v726, %v793
    %vm796 = vcmp.eq.f32.partialorder %v726, 0.0
    %v797 = vand.u32 %v726, 2147483648
    %v798 = vsel %vm796, %v797, %v795
    %v799 = vrsqrt.pop %v728
    %v800 = vmul.f32 %v728, %v799
    %vm801 = vcmp.eq.f32.partialorder %v728, inf
    %v802 = vsel %vm801, %v728, %v800
    %vm803 = vcmp.eq.f32.partialorder %v728, 0.0
    %v804 = vand.u32 %v728, 2147483648
    %v805 = vsel %vm803, %v804, %v802
    %v806 = vrsqrt.pop %v730
    %v807 = vmul.f32 %v730, %v806
    %vm808 = vcmp.eq.f32.partialorder %v730, inf
    %v809 = vsel %vm808, %v730, %v807
    %vm810 = vcmp.eq.f32.partialorder %v730, 0.0
    %v811 = vand.u32 %v730, 2147483648
    %v812 = vsel %vm810, %v811, %v809
    %v813 = vrsqrt.pop %v732
    %v814 = vmul.f32 %v732, %v813
    %vm815 = vcmp.eq.f32.partialorder %v732, inf
    %v816 = vsel %vm815, %v732, %v814
    %vm817 = vcmp.eq.f32.partialorder %v732, 0.0
    %v818 = vand.u32 %v732, 2147483648
    %v819 = vsel %vm817, %v818, %v816
    %v820 = vrsqrt.pop %v734
    %v821 = vmul.f32 %v734, %v820
    %vm822 = vcmp.eq.f32.partialorder %v734, inf
    %v823 = vsel %vm822, %v734, %v821
    %vm824 = vcmp.eq.f32.partialorder %v734, 0.0
    %v825 = vand.u32 %v734, 2147483648
    %v826 = vsel %vm824, %v825, %v823
    %v827 = vrsqrt.pop %v736
    %v828 = vmul.f32 %v736, %v827
    %vm829 = vcmp.eq.f32.partialorder %v736, inf
    %v830 = vsel %vm829, %v736, %v828
    %vm831 = vcmp.eq.f32.partialorder %v736, 0.0
    %v832 = vand.u32 %v736, 2147483648
    %v833 = vsel %vm831, %v832, %v830
    %v834 = vrsqrt.pop %v738
    %v835 = vmul.f32 %v738, %v834
    %vm836 = vcmp.eq.f32.partialorder %v738, inf
    %v837 = vsel %vm836, %v738, %v835
    %vm838 = vcmp.eq.f32.partialorder %v738, 0.0
    %v839 = vand.u32 %v738, 2147483648
    %v840 = vsel %vm838, %v839, %v837
    %v841 = vrsqrt.pop %v740
    %v842 = vmul.f32 %v740, %v841
    %vm843 = vcmp.eq.f32.partialorder %v740, inf
    %v844 = vsel %vm843, %v740, %v842
    %vm845 = vcmp.eq.f32.partialorder %v740, 0.0
    %v846 = vand.u32 %v740, 2147483648
    %v847 = vsel %vm845, %v846, %v844
    %v848 = vrsqrt.pop %v742
    %v849 = vmul.f32 %v742, %v848
    %vm850 = vcmp.eq.f32.partialorder %v742, inf
    %v851 = vsel %vm850, %v742, %v849
    %vm852 = vcmp.eq.f32.partialorder %v742, 0.0
    %v853 = vand.u32 %v742, 2147483648
    %v854 = vsel %vm852, %v853, %v851
    %v855 = vadd.f32 %v749, %v756
    %v856 = vadd.f32 %v855, %v763
    %v857 = vadd.f32 %v856, %v770
    %v858 = vadd.f32 %v857, %v777
    %v859 = vadd.f32 %v858, %v784
    %v860 = vadd.f32 %v859, %v791
    %v861 = vadd.f32 %v860, %v798
    %862 = vadd.xlane.f32.xlu0 %v861
    %v863 = vpop.xlane.xlu0 %862
    %v864 = vadd.f32 %v805, %v812
    %v865 = vadd.f32 %v864, %v819
    %v866 = vadd.f32 %v865, %v826
    %v867 = vadd.f32 %v866, %v833
    %v868 = vadd.f32 %v867, %v840
    %v869 = vadd.f32 %v868, %v847
    %v870 = vadd.f32 %v869, %v854
    %871 = vadd.xlane.f32.xlu0 %v870
    %v872 = vpop.xlane.xlu0 %871
    %v873 = vrcp.pop %v863
    %v874 = vmul.f32 1.0, %v873
    %v875 = vrcp.pop %v872
    %v876 = vmul.f32 1.0, %v875
    %v877 = vmul.f32 %v749, %v874
    %v878 = vmul.f32 %v756, %v874
    %v879 = vmul.f32 %v763, %v874
    %v880 = vmul.f32 %v770, %v874
    %v881 = vmul.f32 %v777, %v874
    %v882 = vmul.f32 %v784, %v874
    %v883 = vmul.f32 %v791, %v874
    %v884 = vmul.f32 %v798, %v874
    %v885 = vmul.f32 %v805, %v876
    %v886 = vmul.f32 %v812, %v876
    %v887 = vmul.f32 %v819, %v876
    %v888 = vmul.f32 %v826, %v876
    %v889 = vmul.f32 %v833, %v876
    %v890 = vmul.f32 %v840, %v876
    %v891 = vmul.f32 %v847, %v876
    %v892 = vmul.f32 %v854, %v876
    %v893 = vpack.c.bf16 %v885, %v877
    %v894 = vpack.c.bf16 %v886, %v878
    %v895 = vpack.c.bf16 %v887, %v879
    %v896 = vpack.c.bf16 %v888, %v880
    %v897 = vpack.c.bf16 %v889, %v881
    %v898 = vpack.c.bf16 %v890, %v882
    %v899 = vpack.c.bf16 %v891, %v883
    %v900 = vpack.c.bf16 %v892, %v884
    %v901 = vld [vmem:[%s5] sm:$0xf]
    %v902 = vld [vmem:[%s5 + $0x4] sm:$0xf]
    %v903 = vld [vmem:[%s5 + $0x8] sm:$0xf]
    %v904 = vld [vmem:[%s5 + $0xc] sm:$0xf]
    %v905 = vld [vmem:[%s5 + $0x10] sm:$0xf]
    %v906 = vld [vmem:[%s5 + $0x14] sm:$0xf]
    %v907 = vld [vmem:[%s5 + $0x18] sm:$0xf]
    %v908 = vld [vmem:[%s5 + $0x1c] sm:$0xf]
    %v909 = vld [vmem:[%s5 + $0x20] sm:$0xf]
    %v910 = vld [vmem:[%s5 + $0x24] sm:$0xf]
    %v911 = vld [vmem:[%s5 + $0x28] sm:$0xf]
    %v912 = vld [vmem:[%s5 + $0x2c] sm:$0xf]
    %v913 = vld [vmem:[%s5 + $0x30] sm:$0xf]
    %v914 = vld [vmem:[%s5 + $0x34] sm:$0xf]
    %v915 = vld [vmem:[%s5 + $0x38] sm:$0xf]
    %v916 = vld [vmem:[%s5 + $0x3c] sm:$0xf]
    %v917 = vld [vmem:[%s5 + $0x40] sm:$0xf]
    %v918 = vld [vmem:[%s5 + $0x44] sm:$0xf]
    %v919 = vld [vmem:[%s5 + $0x48] sm:$0xf]
    %v920 = vld [vmem:[%s5 + $0x4c] sm:$0xf]
    %v921 = vld [vmem:[%s5 + $0x50] sm:$0xf]
    %v922 = vld [vmem:[%s5 + $0x54] sm:$0xf]
    %v923 = vld [vmem:[%s5 + $0x58] sm:$0xf]
    %v924 = vld [vmem:[%s5 + $0x5c] sm:$0xf]
    %v925 = vld [vmem:[%s5 + $0x60] sm:$0xf]
    %v926 = vld [vmem:[%s5 + $0x64] sm:$0xf]
    %v927 = vld [vmem:[%s5 + $0x68] sm:$0xf]
    %v928 = vld [vmem:[%s5 + $0x6c] sm:$0xf]
    %v929 = vld [vmem:[%s5 + $0x70] sm:$0xf]
    %v930 = vld [vmem:[%s5 + $0x74] sm:$0xf]
    %v931 = vld [vmem:[%s5 + $0x78] sm:$0xf]
    %v932 = vld [vmem:[%s5 + $0x7c] sm:$0xf]
    %v933 = vld [vmem:[%s5 + $0x80] sm:$0xf]
    %v934 = vld [vmem:[%s5 + $0x84] sm:$0xf]
    %v935 = vld [vmem:[%s5 + $0x88] sm:$0xf]
    %v936 = vld [vmem:[%s5 + $0x8c] sm:$0xf]
    %v937 = vld [vmem:[%s5 + $0x90] sm:$0xf]
    %v938 = vld [vmem:[%s5 + $0x94] sm:$0xf]
    %v939 = vld [vmem:[%s5 + $0x98] sm:$0xf]
    %v940 = vld [vmem:[%s5 + $0x9c] sm:$0xf]
    %v941 = vld [vmem:[%s5 + $0xa0] sm:$0xf]
    %v942 = vld [vmem:[%s5 + $0xa4] sm:$0xf]
    %v943 = vld [vmem:[%s5 + $0xa8] sm:$0xf]
    %v944 = vld [vmem:[%s5 + $0xac] sm:$0xf]
    %v945 = vld [vmem:[%s5 + $0xb0] sm:$0xf]
    %v946 = vld [vmem:[%s5 + $0xb4] sm:$0xf]
    %v947 = vld [vmem:[%s5 + $0xb8] sm:$0xf]
    %v948 = vld [vmem:[%s5 + $0xbc] sm:$0xf]
    %v949 = vld [vmem:[%s5 + $0xc0] sm:$0xf]
    %v950 = vld [vmem:[%s5 + $0xc4] sm:$0xf]
    %v951 = vld [vmem:[%s5 + $0xc8] sm:$0xf]
    %v952 = vld [vmem:[%s5 + $0xcc] sm:$0xf]
    %v953 = vld [vmem:[%s5 + $0xd0] sm:$0xf]
    %v954 = vld [vmem:[%s5 + $0xd4] sm:$0xf]
    %v955 = vld [vmem:[%s5 + $0xd8] sm:$0xf]
    %v956 = vld [vmem:[%s5 + $0xdc] sm:$0xf]
    %v957 = vld [vmem:[%s5 + $0xe0] sm:$0xf]
    %v958 = vld [vmem:[%s5 + $0xe4] sm:$0xf]
    %v959 = vld [vmem:[%s5 + $0xe8] sm:$0xf]
    %v960 = vld [vmem:[%s5 + $0xec] sm:$0xf]
    %v961 = vld [vmem:[%s5 + $0xf0] sm:$0xf]
    %v962 = vld [vmem:[%s5 + $0xf4] sm:$0xf]
    %v963 = vld [vmem:[%s5 + $0xf8] sm:$0xf]
    %v964 = vld [vmem:[%s5 + $0xfc] sm:$0xf]
    %v965 = vld [vmem:[%s5 + $0x100] sm:$0xf]
    %v966 = vld [vmem:[%s5 + $0x104] sm:$0xf]
    %v967 = vld [vmem:[%s5 + $0x108] sm:$0xf]
    %v968 = vld [vmem:[%s5 + $0x10c] sm:$0xf]
    %v969 = vld [vmem:[%s5 + $0x110] sm:$0xf]
    %v970 = vld [vmem:[%s5 + $0x114] sm:$0xf]
    %v971 = vld [vmem:[%s5 + $0x118] sm:$0xf]
    %v972 = vld [vmem:[%s5 + $0x11c] sm:$0xf]
    %v973 = vld [vmem:[%s5 + $0x120] sm:$0xf]
    %v974 = vld [vmem:[%s5 + $0x124] sm:$0xf]
    %v975 = vld [vmem:[%s5 + $0x128] sm:$0xf]
    %v976 = vld [vmem:[%s5 + $0x12c] sm:$0xf]
    %v977 = vld [vmem:[%s5 + $0x130] sm:$0xf]
    %v978 = vld [vmem:[%s5 + $0x134] sm:$0xf]
    %v979 = vld [vmem:[%s5 + $0x138] sm:$0xf]
    %v980 = vld [vmem:[%s5 + $0x13c] sm:$0xf]
    %v981 = vld [vmem:[%s5 + $0x140] sm:$0xf]
    %v982 = vld [vmem:[%s5 + $0x144] sm:$0xf]
    %v983 = vld [vmem:[%s5 + $0x148] sm:$0xf]
    %v984 = vld [vmem:[%s5 + $0x14c] sm:$0xf]
    %v985 = vld [vmem:[%s5 + $0x150] sm:$0xf]
    %v986 = vld [vmem:[%s5 + $0x154] sm:$0xf]
    %v987 = vld [vmem:[%s5 + $0x158] sm:$0xf]
    %v988 = vld [vmem:[%s5 + $0x15c] sm:$0xf]
    %v989 = vld [vmem:[%s5 + $0x160] sm:$0xf]
    %v990 = vld [vmem:[%s5 + $0x164] sm:$0xf]
    %v991 = vld [vmem:[%s5 + $0x168] sm:$0xf]
    %v992 = vld [vmem:[%s5 + $0x16c] sm:$0xf]
    %v993 = vld [vmem:[%s5 + $0x170] sm:$0xf]
    %v994 = vld [vmem:[%s5 + $0x174] sm:$0xf]
    %v995 = vld [vmem:[%s5 + $0x178] sm:$0xf]
    %v996 = vld [vmem:[%s5 + $0x17c] sm:$0xf]
    %v997 = vld [vmem:[%s5 + $0x180] sm:$0xf]
    %v998 = vld [vmem:[%s5 + $0x184] sm:$0xf]
    %v999 = vld [vmem:[%s5 + $0x188] sm:$0xf]
    %v1000 = vld [vmem:[%s5 + $0x18c] sm:$0xf]
    %v1001 = vld [vmem:[%s5 + $0x190] sm:$0xf]
    %v1002 = vld [vmem:[%s5 + $0x194] sm:$0xf]
    %v1003 = vld [vmem:[%s5 + $0x198] sm:$0xf]
    %v1004 = vld [vmem:[%s5 + $0x19c] sm:$0xf]
    %v1005 = vld [vmem:[%s5 + $0x1a0] sm:$0xf]
    %v1006 = vld [vmem:[%s5 + $0x1a4] sm:$0xf]
    %v1007 = vld [vmem:[%s5 + $0x1a8] sm:$0xf]
    %v1008 = vld [vmem:[%s5 + $0x1ac] sm:$0xf]
    %v1009 = vld [vmem:[%s5 + $0x1b0] sm:$0xf]
    %v1010 = vld [vmem:[%s5 + $0x1b4] sm:$0xf]
    %v1011 = vld [vmem:[%s5 + $0x1b8] sm:$0xf]
    %v1012 = vld [vmem:[%s5 + $0x1bc] sm:$0xf]
    %v1013 = vld [vmem:[%s5 + $0x1c0] sm:$0xf]
    %v1014 = vld [vmem:[%s5 + $0x1c4] sm:$0xf]
    %v1015 = vld [vmem:[%s5 + $0x1c8] sm:$0xf]
    %v1016 = vld [vmem:[%s5 + $0x1cc] sm:$0xf]
    %v1017 = vld [vmem:[%s5 + $0x1d0] sm:$0xf]
    %v1018 = vld [vmem:[%s5 + $0x1d4] sm:$0xf]
    %v1019 = vld [vmem:[%s5 + $0x1d8] sm:$0xf]
    %v1020 = vld [vmem:[%s5 + $0x1dc] sm:$0xf]
    %v1021 = vld [vmem:[%s5 + $0x1e0] sm:$0xf]
    %v1022 = vld [vmem:[%s5 + $0x1e4] sm:$0xf]
    %v1023 = vld [vmem:[%s5 + $0x1e8] sm:$0xf]
    %v1024 = vld [vmem:[%s5 + $0x1ec] sm:$0xf]
    %v1025 = vld [vmem:[%s5 + $0x1f0] sm:$0xf]
    %v1026 = vld [vmem:[%s5 + $0x1f4] sm:$0xf]
    %v1027 = vld [vmem:[%s5 + $0x1f8] sm:$0xf]
    %v1028 = vld [vmem:[%s5 + $0x1fc] sm:$0xf]
    %v1157 = vunpack.c.l.b16 %v901
    %v1158 = vunpack.c.l.b16 %v902
    %v1159 = vunpack.c.l.b16 %v903
    %v1160 = vunpack.c.l.b16 %v904
    %v1161 = vunpack.c.l.b16 %v905
    %v1162 = vunpack.c.l.b16 %v906
    %v1163 = vunpack.c.l.b16 %v907
    %v1164 = vunpack.c.l.b16 %v908
    %v1165 = vunpack.c.l.b16 %v909
    %v1166 = vunpack.c.l.b16 %v910
    %v1167 = vunpack.c.l.b16 %v911
    %v1168 = vunpack.c.l.b16 %v912
    %v1169 = vunpack.c.l.b16 %v913
    %v1170 = vunpack.c.l.b16 %v914
    %v1171 = vunpack.c.l.b16 %v915
    %v1172 = vunpack.c.l.b16 %v916
    %v1173 = vunpack.c.l.b16 %v917
    %v1174 = vunpack.c.l.b16 %v918
    %v1175 = vunpack.c.l.b16 %v919
    %v1176 = vunpack.c.l.b16 %v920
    %v1177 = vunpack.c.l.b16 %v921
    %v1178 = vunpack.c.l.b16 %v922
    %v1179 = vunpack.c.l.b16 %v923
    %v1180 = vunpack.c.l.b16 %v924
    %v1181 = vunpack.c.l.b16 %v925
    %v1182 = vunpack.c.l.b16 %v926
    %v1183 = vunpack.c.l.b16 %v927
    %v1184 = vunpack.c.l.b16 %v928
    %v1185 = vunpack.c.l.b16 %v929
    %v1186 = vunpack.c.l.b16 %v930
    %v1187 = vunpack.c.l.b16 %v931
    %v1188 = vunpack.c.l.b16 %v932
    %v1189 = vunpack.c.l.b16 %v933
    %v1190 = vunpack.c.l.b16 %v934
    %v1191 = vunpack.c.l.b16 %v935
    %v1192 = vunpack.c.l.b16 %v936
    %v1193 = vunpack.c.l.b16 %v937
    %v1194 = vunpack.c.l.b16 %v938
    %v1195 = vunpack.c.l.b16 %v939
    %v1196 = vunpack.c.l.b16 %v940
    %v1197 = vunpack.c.l.b16 %v941
    %v1198 = vunpack.c.l.b16 %v942
    %v1199 = vunpack.c.l.b16 %v943
    %v1200 = vunpack.c.l.b16 %v944
    %v1201 = vunpack.c.l.b16 %v945
    %v1202 = vunpack.c.l.b16 %v946
    %v1203 = vunpack.c.l.b16 %v947
    %v1204 = vunpack.c.l.b16 %v948
    %v1205 = vunpack.c.l.b16 %v949
    %v1206 = vunpack.c.l.b16 %v950
    %v1207 = vunpack.c.l.b16 %v951
    %v1208 = vunpack.c.l.b16 %v952
    %v1209 = vunpack.c.l.b16 %v953
    %v1210 = vunpack.c.l.b16 %v954
    %v1211 = vunpack.c.l.b16 %v955
    %v1212 = vunpack.c.l.b16 %v956
    %v1213 = vunpack.c.l.b16 %v957
    %v1214 = vunpack.c.l.b16 %v958
    %v1215 = vunpack.c.l.b16 %v959
    %v1216 = vunpack.c.l.b16 %v960
    %v1217 = vunpack.c.l.b16 %v961
    %v1218 = vunpack.c.l.b16 %v962
    %v1219 = vunpack.c.l.b16 %v963
    %v1220 = vunpack.c.l.b16 %v964
    %v1221 = vunpack.c.l.b16 %v965
    %v1222 = vunpack.c.l.b16 %v966
    %v1223 = vunpack.c.l.b16 %v967
    %v1224 = vunpack.c.l.b16 %v968
    %v1225 = vunpack.c.l.b16 %v969
    %v1226 = vunpack.c.l.b16 %v970
    %v1227 = vunpack.c.l.b16 %v971
    %v1228 = vunpack.c.l.b16 %v972
    %v1229 = vunpack.c.l.b16 %v973
    %v1230 = vunpack.c.l.b16 %v974
    %v1231 = vunpack.c.l.b16 %v975
    %v1232 = vunpack.c.l.b16 %v976
    %v1233 = vunpack.c.l.b16 %v977
    %v1234 = vunpack.c.l.b16 %v978
    %v1235 = vunpack.c.l.b16 %v979
    %v1236 = vunpack.c.l.b16 %v980
    %v1237 = vunpack.c.l.b16 %v981
    %v1238 = vunpack.c.l.b16 %v982
    %v1239 = vunpack.c.l.b16 %v983
    %v1240 = vunpack.c.l.b16 %v984
    %v1241 = vunpack.c.l.b16 %v985
    %v1242 = vunpack.c.l.b16 %v986
    %v1243 = vunpack.c.l.b16 %v987
    %v1244 = vunpack.c.l.b16 %v988
    %v1245 = vunpack.c.l.b16 %v989
    %v1246 = vunpack.c.l.b16 %v990
    %v1247 = vunpack.c.l.b16 %v991
    %v1248 = vunpack.c.l.b16 %v992
    %v1249 = vunpack.c.l.b16 %v993
    %v1250 = vunpack.c.l.b16 %v994
    %v1251 = vunpack.c.l.b16 %v995
    %v1252 = vunpack.c.l.b16 %v996
    %v1253 = vunpack.c.l.b16 %v997
    %v1254 = vunpack.c.l.b16 %v998
    %v1255 = vunpack.c.l.b16 %v999
    %v1256 = vunpack.c.l.b16 %v1000
    %v1257 = vunpack.c.l.b16 %v1001
    %v1258 = vunpack.c.l.b16 %v1002
    %v1259 = vunpack.c.l.b16 %v1003
    %v1260 = vunpack.c.l.b16 %v1004
    %v1261 = vunpack.c.l.b16 %v1005
    %v1262 = vunpack.c.l.b16 %v1006
    %v1263 = vunpack.c.l.b16 %v1007
    %v1264 = vunpack.c.l.b16 %v1008
    %v1265 = vunpack.c.l.b16 %v1009
    %v1266 = vunpack.c.l.b16 %v1010
    %v1267 = vunpack.c.l.b16 %v1011
    %v1268 = vunpack.c.l.b16 %v1012
    %v1269 = vunpack.c.l.b16 %v1013
    %v1270 = vunpack.c.l.b16 %v1014
    %v1271 = vunpack.c.l.b16 %v1015
    %v1272 = vunpack.c.l.b16 %v1016
    %v1273 = vunpack.c.l.b16 %v1017
    %v1274 = vunpack.c.l.b16 %v1018
    %v1275 = vunpack.c.l.b16 %v1019
    %v1276 = vunpack.c.l.b16 %v1020
    %v1277 = vunpack.c.l.b16 %v1021
    %v1278 = vunpack.c.l.b16 %v1022
    %v1279 = vunpack.c.l.b16 %v1023
    %v1280 = vunpack.c.l.b16 %v1024
    %v1281 = vunpack.c.l.b16 %v1025
    %v1282 = vunpack.c.l.b16 %v1026
    %v1283 = vunpack.c.l.b16 %v1027
    %v1284 = vunpack.c.l.b16 %v1028
    %v1285 = vpack.c.b16 %v1158, %v1157
    %v1286 = vpack.c.b16 %v1160, %v1159
    %v1287 = vpack.c.b16 %v1162, %v1161
    %v1288 = vpack.c.b16 %v1164, %v1163
    %v1289 = vpack.c.b16 %v1166, %v1165
    %v1290 = vpack.c.b16 %v1168, %v1167
    %v1291 = vpack.c.b16 %v1170, %v1169
    %v1292 = vpack.c.b16 %v1172, %v1171
    %v1293 = vpack.c.b16 %v1174, %v1173
    %v1294 = vpack.c.b16 %v1176, %v1175
    %v1295 = vpack.c.b16 %v1178, %v1177
    %v1296 = vpack.c.b16 %v1180, %v1179
    %v1297 = vpack.c.b16 %v1182, %v1181
    %v1298 = vpack.c.b16 %v1184, %v1183
    %v1299 = vpack.c.b16 %v1186, %v1185
    %v1300 = vpack.c.b16 %v1188, %v1187
    %v1301 = vpack.c.b16 %v1190, %v1189
    %v1302 = vpack.c.b16 %v1192, %v1191
    %v1303 = vpack.c.b16 %v1194, %v1193
    %v1304 = vpack.c.b16 %v1196, %v1195
    %v1305 = vpack.c.b16 %v1198, %v1197
    %v1306 = vpack.c.b16 %v1200, %v1199
    %v1307 = vpack.c.b16 %v1202, %v1201
    %v1308 = vpack.c.b16 %v1204, %v1203
    %v1309 = vpack.c.b16 %v1206, %v1205
    %v1310 = vpack.c.b16 %v1208, %v1207
    %v1311 = vpack.c.b16 %v1210, %v1209
    %v1312 = vpack.c.b16 %v1212, %v1211
    %v1313 = vpack.c.b16 %v1214, %v1213
    %v1314 = vpack.c.b16 %v1216, %v1215
    %v1315 = vpack.c.b16 %v1218, %v1217
    %v1316 = vpack.c.b16 %v1220, %v1219
    %v1317 = vpack.c.b16 %v1222, %v1221
    %v1318 = vpack.c.b16 %v1224, %v1223
    %v1319 = vpack.c.b16 %v1226, %v1225
    %v1320 = vpack.c.b16 %v1228, %v1227
    %v1321 = vpack.c.b16 %v1230, %v1229
    %v1322 = vpack.c.b16 %v1232, %v1231
    %v1323 = vpack.c.b16 %v1234, %v1233
    %v1324 = vpack.c.b16 %v1236, %v1235
    %v1325 = vpack.c.b16 %v1238, %v1237
    %v1326 = vpack.c.b16 %v1240, %v1239
    %v1327 = vpack.c.b16 %v1242, %v1241
    %v1328 = vpack.c.b16 %v1244, %v1243
    %v1329 = vpack.c.b16 %v1246, %v1245
    %v1330 = vpack.c.b16 %v1248, %v1247
    %v1331 = vpack.c.b16 %v1250, %v1249
    %v1332 = vpack.c.b16 %v1252, %v1251
    %v1333 = vpack.c.b16 %v1254, %v1253
    %v1334 = vpack.c.b16 %v1256, %v1255
    %v1335 = vpack.c.b16 %v1258, %v1257
    %v1336 = vpack.c.b16 %v1260, %v1259
    %v1337 = vpack.c.b16 %v1262, %v1261
    %v1338 = vpack.c.b16 %v1264, %v1263
    %v1339 = vpack.c.b16 %v1266, %v1265
    %v1340 = vpack.c.b16 %v1268, %v1267
    %v1341 = vpack.c.b16 %v1270, %v1269
    %v1342 = vpack.c.b16 %v1272, %v1271
    %v1343 = vpack.c.b16 %v1274, %v1273
    %v1344 = vpack.c.b16 %v1276, %v1275
    %v1345 = vpack.c.b16 %v1278, %v1277
    %v1346 = vpack.c.b16 %v1280, %v1279
    %v1347 = vpack.c.b16 %v1282, %v1281
    %v1348 = vpack.c.b16 %v1284, %v1283
    %1413 = vmatprep.subr.bf16.mxu0 0
    %1414 = vmatpush1.bf16.msra.mxu0 %v1285
    %1415 = vmatprep.subr.bf16.mxu0 0
    %1416 = vmatpush1.bf16.msra.mxu0 %v1286
    %1417 = vmatprep.subr.bf16.mxu0 0
    %1418 = vmatpush1.bf16.msra.mxu0 %v1287
    %1419 = vmatprep.subr.bf16.mxu0 0
    %1420 = vmatpush1.bf16.msra.mxu0 %v1288
    %1421 = vmatprep.subr.bf16.mxu0 0
    %1422 = vmatpush1.bf16.msra.mxu0 %v1289
    %1423 = vmatprep.subr.bf16.mxu0 0
    %1424 = vmatpush1.bf16.msra.mxu0 %v1290
    %1425 = vmatprep.subr.bf16.mxu0 0
    %1426 = vmatpush1.bf16.msra.mxu0 %v1291
    %1427 = vmatprep.subr.bf16.mxu0 0
    %1428 = vmatpush1.bf16.msra.mxu0 %v1292
    %1429 = vmatprep.subr.bf16.mxu0 0
    %1430 = vmatpush1.bf16.msra.mxu0 %v1293
    %1431 = vmatprep.subr.bf16.mxu0 0
    %1432 = vmatpush1.bf16.msra.mxu0 %v1294
    %1433 = vmatprep.subr.bf16.mxu0 0
    %1434 = vmatpush1.bf16.msra.mxu0 %v1295
    %1435 = vmatprep.subr.bf16.mxu0 0
    %1436 = vmatpush1.bf16.msra.mxu0 %v1296
    %1437 = vmatprep.subr.bf16.mxu0 0
    %1438 = vmatpush1.bf16.msra.mxu0 %v1297
    %1439 = vmatprep.subr.bf16.mxu0 0
    %1440 = vmatpush1.bf16.msra.mxu0 %v1298
    %1441 = vmatprep.subr.bf16.mxu0 0
    %1442 = vmatpush1.bf16.msra.mxu0 %v1299
    %1443 = vmatprep.subr.bf16.mxu0 0
    %1444 = vmatpush1.bf16.msra.mxu0 %v1300
    %1445 = vmatprep.mubr.bf16.mxu0 %v894
    %1446 = vmatmul.mubr.bf16.gmra.mrb[0].mxu0 %v893
    %v1447 = vpop.f32.mrb[0].mxu0
    %v1448 = vadd.f32 0.0, %v1447
    %v1449 = vpop.f32.mrb[0].mxu0
    %v1450 = vpop.f32.mrb[0].mxu0
    %v1451 = vadd.f32 0.0, %v1450
    %v1452 = vpop.f32.mrb[0].mxu0
    %1453 = vdwg.mxu0
    %1454 = vmatprep.subr.bf16.mxu0 0
    %1455 = vmatpush1.bf16.msra.mxu0 %v1301
    %1456 = vmatprep.subr.bf16.mxu0 0
    %1457 = vmatpush1.bf16.msra.mxu0 %v1302
    %1458 = vmatprep.subr.bf16.mxu0 0
    %1459 = vmatpush1.bf16.msra.mxu0 %v1303
    %1460 = vmatprep.subr.bf16.mxu0 0
    %1461 = vmatpush1.bf16.msra.mxu0 %v1304
    %1462 = vmatprep.subr.bf16.mxu0 0
    %1463 = vmatpush1.bf16.msra.mxu0 %v1305
    %1464 = vmatprep.subr.bf16.mxu0 0
    %1465 = vmatpush1.bf16.msra.mxu0 %v1306
    %1466 = vmatprep.subr.bf16.mxu0 0
    %1467 = vmatpush1.bf16.msra.mxu0 %v1307
    %1468 = vmatprep.subr.bf16.mxu0 0
    %1469 = vmatpush1.bf16.msra.mxu0 %v1308
    %1470 = vmatprep.subr.bf16.mxu0 0
    %1471 = vmatpush1.bf16.msra.mxu0 %v1309
    %1472 = vmatprep.subr.bf16.mxu0 0
    %1473 = vmatpush1.bf16.msra.mxu0 %v1310
    %1474 = vmatprep.subr.bf16.mxu0 0
    %1475 = vmatpush1.bf16.msra.mxu0 %v1311
    %1476 = vmatprep.subr.bf16.mxu0 0
    %1477 = vmatpush1.bf16.msra.mxu0 %v1312
    %1478 = vmatprep.subr.bf16.mxu0 0
    %1479 = vmatpush1.bf16.msra.mxu0 %v1313
    %1480 = vmatprep.subr.bf16.mxu0 0
    %1481 = vmatpush1.bf16.msra.mxu0 %v1314
    %1482 = vmatprep.subr.bf16.mxu0 0
    %1483 = vmatpush1.bf16.msra.mxu0 %v1315
    %1484 = vmatprep.subr.bf16.mxu0 0
    %1485 = vmatpush1.bf16.msra.mxu0 %v1316
    %1486 = vmatprep.mubr.bf16.mxu0 %v896
    %1487 = vmatmul.mubr.bf16.gmra.mrb[0].mxu0 %v895
    %v1488 = vpop.f32.mrb[0].mxu0
    %v1489 = vadd.f32 %v1448, %v1488
    %v1490 = vpop.f32.mrb[0].mxu0
    %v1491 = vpop.f32.mrb[0].mxu0
    %v1492 = vadd.f32 %v1451, %v1491
    %v1493 = vpop.f32.mrb[0].mxu0
    %1494 = vdwg.mxu0
    %1495 = vmatprep.subr.bf16.mxu0 0
    %1496 = vmatpush1.bf16.msra.mxu0 %v1317
    %1497 = vmatprep.subr.bf16.mxu0 0
    %1498 = vmatpush1.bf16.msra.mxu0 %v1318
    %1499 = vmatprep.subr.bf16.mxu0 0
    %1500 = vmatpush1.bf16.msra.mxu0 %v1319
    %1501 = vmatprep.subr.bf16.mxu0 0
    %1502 = vmatpush1.bf16.msra.mxu0 %v1320
    %1503 = vmatprep.subr.bf16.mxu0 0
    %1504 = vmatpush1.bf16.msra.mxu0 %v1321
    %1505 = vmatprep.subr.bf16.mxu0 0
    %1506 = vmatpush1.bf16.msra.mxu0 %v1322
    %1507 = vmatprep.subr.bf16.mxu0 0
    %1508 = vmatpush1.bf16.msra.mxu0 %v1323
    %1509 = vmatprep.subr.bf16.mxu0 0
    %1510 = vmatpush1.bf16.msra.mxu0 %v1324
    %1511 = vmatprep.subr.bf16.mxu0 0
    %1512 = vmatpush1.bf16.msra.mxu0 %v1325
    %1513 = vmatprep.subr.bf16.mxu0 0
    %1514 = vmatpush1.bf16.msra.mxu0 %v1326
    %1515 = vmatprep.subr.bf16.mxu0 0
    %1516 = vmatpush1.bf16.msra.mxu0 %v1327
    %1517 = vmatprep.subr.bf16.mxu0 0
    %1518 = vmatpush1.bf16.msra.mxu0 %v1328
    %1519 = vmatprep.subr.bf16.mxu0 0
    %1520 = vmatpush1.bf16.msra.mxu0 %v1329
    %1521 = vmatprep.subr.bf16.mxu0 0
    %1522 = vmatpush1.bf16.msra.mxu0 %v1330
    %1523 = vmatprep.subr.bf16.mxu0 0
    %1524 = vmatpush1.bf16.msra.mxu0 %v1331
    %1525 = vmatprep.subr.bf16.mxu0 0
    %1526 = vmatpush1.bf16.msra.mxu0 %v1332
    %1527 = vmatprep.mubr.bf16.mxu0 %v898
    %1528 = vmatmul.mubr.bf16.gmra.mrb[0].mxu0 %v897
    %v1529 = vpop.f32.mrb[0].mxu0
    %v1530 = vadd.f32 %v1489, %v1529
    %v1531 = vpop.f32.mrb[0].mxu0
    %v1532 = vpop.f32.mrb[0].mxu0
    %v1533 = vadd.f32 %v1492, %v1532
    %v1534 = vpop.f32.mrb[0].mxu0
    %1535 = vdwg.mxu0
    %1536 = vmatprep.subr.bf16.mxu0 0
    %1537 = vmatpush1.bf16.msra.mxu0 %v1333
    %1538 = vmatprep.subr.bf16.mxu0 0
    %1539 = vmatpush1.bf16.msra.mxu0 %v1334
    %1540 = vmatprep.subr.bf16.mxu0 0
    %1541 = vmatpush1.bf16.msra.mxu0 %v1335
    %1542 = vmatprep.subr.bf16.mxu0 0
    %1543 = vmatpush1.bf16.msra.mxu0 %v1336
    %1544 = vmatprep.subr.bf16.mxu0 0
    %1545 = vmatpush1.bf16.msra.mxu0 %v1337
    %1546 = vmatprep.subr.bf16.mxu0 0
    %1547 = vmatpush1.bf16.msra.mxu0 %v1338
    %1548 = vmatprep.subr.bf16.mxu0 0
    %1549 = vmatpush1.bf16.msra.mxu0 %v1339
    %1550 = vmatprep.subr.bf16.mxu0 0
    %1551 = vmatpush1.bf16.msra.mxu0 %v1340
    %1552 = vmatprep.subr.bf16.mxu0 0
    %1553 = vmatpush1.bf16.msra.mxu0 %v1341
    %1554 = vmatprep.subr.bf16.mxu0 0
    %1555 = vmatpush1.bf16.msra.mxu0 %v1342
    %1556 = vmatprep.subr.bf16.mxu0 0
    %1557 = vmatpush1.bf16.msra.mxu0 %v1343
    %1558 = vmatprep.subr.bf16.mxu0 0
    %1559 = vmatpush1.bf16.msra.mxu0 %v1344
    %1560 = vmatprep.subr.bf16.mxu0 0
    %1561 = vmatpush1.bf16.msra.mxu0 %v1345
    %1562 = vmatprep.subr.bf16.mxu0 0
    %1563 = vmatpush1.bf16.msra.mxu0 %v1346
    %1564 = vmatprep.subr.bf16.mxu0 0
    %1565 = vmatpush1.bf16.msra.mxu0 %v1347
    %1566 = vmatprep.subr.bf16.mxu0 0
    %1567 = vmatpush1.bf16.msra.mxu0 %v1348
    %1568 = vmatprep.mubr.bf16.mxu0 %v900
    %1569 = vmatmul.mubr.bf16.gmra.mrb[0].mxu0 %v899
    %v1570 = vpop.f32.mrb[0].mxu0
    %v1571 = vadd.f32 %v1530, %v1570
    %v1572 = vpop.f32.mrb[0].mxu0
    %v1573 = vpop.f32.mrb[0].mxu0
    %v1574 = vadd.f32 %v1533, %v1573
    %v1575 = vpop.f32.mrb[0].mxu0
    %1576 = vdwg.mxu0
    %v1577 = vld [vmem:[%s6] sm:$0xf]
    %v1578 = vld [vmem:[%s6 + $0x4] sm:$0xf]
    %v1579 = vld [vmem:[%s6 + $0x8] sm:$0xf]
    %v1580 = vld [vmem:[%s6 + $0xc] sm:$0xf]
    %v1581 = vld [vmem:[%s6 + $0x10] sm:$0xf]
    %v1582 = vld [vmem:[%s6 + $0x14] sm:$0xf]
    %v1583 = vld [vmem:[%s6 + $0x18] sm:$0xf]
    %v1584 = vld [vmem:[%s6 + $0x1c] sm:$0xf]
    %v1593 = vunpack.c.l.b16 %v1577
    %v1594 = vunpack.c.l.b16 %v1578
    %v1595 = vunpack.c.l.b16 %v1579
    %v1596 = vunpack.c.l.b16 %v1580
    %v1597 = vunpack.c.l.b16 %v1581
    %v1598 = vunpack.c.l.b16 %v1582
    %v1599 = vunpack.c.l.b16 %v1583
    %v1600 = vunpack.c.l.b16 %v1584
    %v1601 = vpack.c.b16 %v1594, %v1593
    %v1602 = vpack.c.b16 %v1596, %v1595
    %v1603 = vpack.c.b16 %v1598, %v1597
    %v1604 = vpack.c.b16 %v1600, %v1599
    %1609 = vmatprep.subr.bf16.mxu0 0
    %1610 = vmatpush1.bf16.msra.mxu0 %v1601
    %1611 = vmatprep.subr.bf16.mxu0 0
    %1612 = vmatpush1.bf16.msra.mxu0 %v1602
    %1613 = vmatprep.subr.bf16.mxu0 0
    %1614 = vmatpush1.bf16.msra.mxu0 %v1603
    %1615 = vmatprep.subr.bf16.mxu0 0
    %1616 = vmatpush1.bf16.msra.mxu0 %v1604
    %1617 = vmatprep.subr.bf16.mxu0 0
    %1618 = vmatpush1.bf16.msra.mxu0 0
    %1619 = vmatprep.subr.bf16.mxu0 0
    %1620 = vmatpush1.bf16.msra.mxu0 0
    %1621 = vmatprep.subr.bf16.mxu0 0
    %1622 = vmatpush1.bf16.msra.mxu0 0
    %1623 = vmatprep.subr.bf16.mxu0 0
    %1624 = vmatpush1.bf16.msra.mxu0 0
    %1625 = vmatprep.subr.bf16.mxu0 0
    %1626 = vmatpush1.bf16.msra.mxu0 0
    %1627 = vmatprep.subr.bf16.mxu0 0
    %1628 = vmatpush1.bf16.msra.mxu0 0
    %1629 = vmatprep.subr.bf16.mxu0 0
    %1630 = vmatpush1.bf16.msra.mxu0 0
    %1631 = vmatprep.subr.bf16.mxu0 0
    %1632 = vmatpush1.bf16.msra.mxu0 0
    %1633 = vmatprep.subr.bf16.mxu0 0
    %1634 = vmatpush1.bf16.msra.mxu0 0
    %1635 = vmatprep.subr.bf16.mxu0 0
    %1636 = vmatpush1.bf16.msra.mxu0 0
    %1637 = vmatprep.subr.bf16.mxu0 0
    %1638 = vmatpush1.bf16.msra.mxu0 0
    %1639 = vmatprep.subr.bf16.mxu0 0
    %1640 = vmatpush1.bf16.msra.mxu0 0
    %1641 = vmatprep.mubr.bf16.mxu0 0
    %1642 = vmatmul.mubr.bf16.gmra.mrb[0].mxu0 %v277
    %v1643 = vpop.f32.mrb[0].mxu0
    %v1644 = vadd.f32 0.0, %v1643
    %v1645 = vpop.f32.mrb[0].mxu0
    %v1646 = vpop.f32.mrb[0].mxu0
    %v1647 = vadd.f32 0.0, %v1646
    %v1648 = vpop.f32.mrb[0].mxu0
    %1649 = vdwg.mxu0
    %v1650 = vld [vmem:[%s2] sm:$0xff]
    %v1651 = vld [vmem:[%s2 + $0x8] sm:$0xff]
    %vm1652 = vcmask 64512
    %v1653 = vsel %vm1652, %v1644, -inf
    %1654 = vmax.xlane.f32.xlu0 %v1653
    %v1655 = vpop.xlane.xlu0 %1654
    %v1656 = vsel %vm1652, %v1647, -inf
    %1657 = vmax.xlane.f32.xlu0 %v1656
    %v1658 = vpop.xlane.xlu0 %1657
    %v1659 = vsub.f32 %v1644, %v1655
    %v1660 = vsub.f32 %v1647, %v1658
    %v1661 = vmul.f32 %v1659, 1.442695
    %v1662 = vpow.pop %v1661
    %v1663 = vmul.f32 %v1660, 1.442695
    %v1664 = vpow.pop %v1663
    %v1665 = vsel %vm1652, %v1662, 0.0
    %1666 = vadd.xlane.f32.xlu0 %v1665
    %v1667 = vpop.xlane.xlu0 %1666
    %v1668 = vsel %vm1652, %v1664, 0.0
    %1669 = vadd.xlane.f32.xlu0 %v1668
    %v1670 = vpop.xlane.xlu0 %1669
    %v1671 = vrcp.pop %v1667
    %v1672 = vmul.f32 1.0, %v1671
    %v1673 = vrcp.pop %v1670
    %v1674 = vmul.f32 1.0, %v1673
    %v1675 = vmul.f32 %v1662, %v1672
    %v1676 = vmul.f32 %v1664, %v1674
    %v1677 = vlog2.pop %v1667
    %v1678 = vmul.f32 %v1677, 0.6931472
    %v1679 = vlog2.pop %v1670
    %v1680 = vmul.f32 %v1679, 0.6931472
    %v1681 = vsub.f32 %v1659, %v1678
    %v1682 = vsub.f32 %v1660, %v1680
    %v1683 = vmul.f32 %v1675, %v1681
    %v1684 = vmul.f32 %v1676, %v1682
    %v1685 = vsel %vm1652, %v1683, 0.0
    %v1686 = vsel %vm1652, %v1684, 0.0
    %v1687 = vadd.f32 %v1685, %v1686
    %1688 = vadd.xlane.f32.xlu0 %v1687
    %v1689 = vpop.xlane.xlu0 %1688
    %v1690 = vrot.slane %v1689, 4
    %v1691 = vadd.f32 %v1689, %v1690
    %v1692 = vrot.slane %v1691, 2
    %v1693 = vadd.f32 %v1691, %v1692
    %v1694 = vrot.slane %v1693, 1
    %v1695 = vadd.f32 %v1693, %v1694
    %s1696 = vtos %v1695
    %s1697 = sadd.f32 %s1696, 0.0
    %v1698 = vadd.f32 %v1650, 1e-20
    %v1699 = vadd.f32 %v1651, 1e-20
    %v1700 = vlog2.pop %v1698
    %v1701 = vmul.f32 %v1700, 0.6931472
    %v1702 = vlog2.pop %v1699
    %v1703 = vmul.f32 %v1702, 0.6931472
    %v1704 = vsub.f32 0.0, %v1701
    %v1705 = vsub.f32 0.0, %v1703
    %v1706 = vadd.f32 %v1704, 1e-20
    %v1707 = vadd.f32 %v1705, 1e-20
    %v1708 = vrcp.pop %v1706
    %v1709 = vmul.f32 %v1662, %v1708
    %v1710 = vrcp.pop %v1707
    %v1711 = vmul.f32 %v1664, %v1710
    %v1712 = vrsqrt.pop %v1709
    %v1713 = vmul.f32 %v1709, %v1712
    %vm1714 = vcmp.eq.f32.partialorder %v1709, inf
    %v1715 = vsel %vm1714, %v1709, %v1713
    %vm1716 = vcmp.eq.f32.partialorder %v1709, 0.0
    %v1717 = vand.u32 %v1709, 2147483648
    %v1718 = vsel %vm1716, %v1717, %v1715
    %v1719 = vrsqrt.pop %v1711
    %v1720 = vmul.f32 %v1711, %v1719
    %vm1721 = vcmp.eq.f32.partialorder %v1711, inf
    %v1722 = vsel %vm1721, %v1711, %v1720
    %vm1723 = vcmp.eq.f32.partialorder %v1711, 0.0
    %v1724 = vand.u32 %v1711, 2147483648
    %v1725 = vsel %vm1723, %v1724, %v1722
    %v1726 = vsel %vm1652, %v1718, 0.0
    %1727 = vadd.xlane.f32.xlu0 %v1726
    %v1728 = vpop.xlane.xlu0 %1727
    %v1729 = vsel %vm1652, %v1725, 0.0
    %1730 = vadd.xlane.f32.xlu0 %v1729
    %v1731 = vpop.xlane.xlu0 %1730
    %v1732 = vrcp.pop %v1728
    %v1733 = vmul.f32 1.0, %v1732
    %v1734 = vrcp.pop %v1731
    %v1735 = vmul.f32 1.0, %v1734
    %v1736 = vmul.f32 %v1718, %v1733
    %v1737 = vmul.f32 %v1725, %v1735
    %vm1738 = vcmask 130112
    %v1739 = vsel %vm1738, %v1644, -inf
    %1740 = vmax.xlane.f32.xlu0 %v1739
    %v1741 = vpop.xlane.xlu0 %1740
    %v1742 = vsel %vm1738, %v1647, -inf
    %1743 = vmax.xlane.f32.xlu0 %v1742
    %v1744 = vpop.xlane.xlu0 %1743
    %v1745 = vsub.f32 %v1644, %v1741
    %v1746 = vsub.f32 %v1647, %v1744
    %v1747 = vmul.f32 %v1745, 1.442695
    %v1748 = vpow.pop %v1747
    %v1749 = vmul.f32 %v1746, 1.442695
    %v1750 = vpow.pop %v1749
    %1753 = vrot.lane.b32.xlu0 %v1748, 120
    %v1754 = vpop.permute.xlu0 %1753
    %1755 = vrot.lane.b32.xlu0 %v1750, 120
    %v1756 = vpop.permute.xlu0 %1755
    %v1759 = vsel %vm1652, %v1754, 0.0
    %1760 = vadd.xlane.f32.xlu0 %v1759
    %v1761 = vpop.xlane.xlu0 %1760
    %v1762 = vsel %vm1652, %v1756, 0.0
    %1763 = vadd.xlane.f32.xlu0 %v1762
    %v1764 = vpop.xlane.xlu0 %1763
    %v1765 = vrcp.pop %v1761
    %v1766 = vmul.f32 1.0, %v1765
    %v1767 = vrcp.pop %v1764
    %v1768 = vmul.f32 1.0, %v1767
    %v1769 = vmul.f32 %v1748, %v1766
    %v1770 = vmul.f32 %v1750, %v1768
    %v1771 = vlog2.pop %v1761
    %v1772 = vmul.f32 %v1771, 0.6931472
    %v1773 = vlog2.pop %v1764
    %v1774 = vmul.f32 %v1773, 0.6931472
    %v1775 = vsub.f32 %v1745, %v1772
    %v1776 = vsub.f32 %v1746, %v1774
    %v1777 = vmul.f32 %v1769, %v1775
    %v1778 = vmul.f32 %v1770, %v1776
    %1781 = vrot.lane.b32.xlu0 %v1777, 120
    %v1782 = vpop.permute.xlu0 %1781
    %1783 = vrot.lane.b32.xlu0 %v1778, 120
    %v1784 = vpop.permute.xlu0 %1783
    %v1787 = vsel %vm1652, %v1782, 0.0
    %v1788 = vsel %vm1652, %v1784, 0.0
    %v1789 = vadd.f32 %v1787, %v1788
    %1790 = vadd.xlane.f32.xlu0 %v1789
    %v1791 = vpop.xlane.xlu0 %1790
    %v1792 = vrot.slane %v1791, 4
    %v1793 = vadd.f32 %v1791, %v1792
    %v1794 = vrot.slane %v1793, 2
    %v1795 = vadd.f32 %v1793, %v1794
    %v1796 = vrot.slane %v1795, 1
    %v1797 = vadd.f32 %v1795, %v1796
    %s1798 = vtos %v1797
    %s1799 = sadd.f32 %s1697, %s1798
    %v1800 = vmul.f32 %v1748, %v1708
    %v1801 = vmul.f32 %v1750, %v1710
    %v1802 = vrsqrt.pop %v1800
    %v1803 = vmul.f32 %v1800, %v1802
    %vm1804 = vcmp.eq.f32.partialorder %v1800, inf
    %v1805 = vsel %vm1804, %v1800, %v1803
    %vm1806 = vcmp.eq.f32.partialorder %v1800, 0.0
    %v1807 = vand.u32 %v1800, 2147483648
    %v1808 = vsel %vm1806, %v1807, %v1805
    %v1809 = vrsqrt.pop %v1801
    %v1810 = vmul.f32 %v1801, %v1809
    %vm1811 = vcmp.eq.f32.partialorder %v1801, inf
    %v1812 = vsel %vm1811, %v1801, %v1810
    %vm1813 = vcmp.eq.f32.partialorder %v1801, 0.0
    %v1814 = vand.u32 %v1801, 2147483648
    %v1815 = vsel %vm1813, %v1814, %v1812
    %1818 = vrot.lane.b32.xlu0 %v1808, 120
    %v1819 = vpop.permute.xlu0 %1818
    %1820 = vrot.lane.b32.xlu0 %v1815, 120
    %v1821 = vpop.permute.xlu0 %1820
    %v1824 = vsel %vm1652, %v1819, 0.0
    %1825 = vadd.xlane.f32.xlu0 %v1824
    %v1826 = vpop.xlane.xlu0 %1825
    %v1827 = vsel %vm1652, %v1821, 0.0
    %1828 = vadd.xlane.f32.xlu0 %v1827
    %v1829 = vpop.xlane.xlu0 %1828
    %v1830 = vrcp.pop %v1826
    %v1831 = vmul.f32 1.0, %v1830
    %v1832 = vrcp.pop %v1829
    %v1833 = vmul.f32 1.0, %v1832
    %v1834 = vmul.f32 %v1808, %v1831
    %v1835 = vmul.f32 %v1815, %v1833
    %vm1836 = vcmask 195712
    %v1837 = vsel %vm1836, %v1644, -inf
    %1838 = vmax.xlane.f32.xlu0 %v1837
    %v1839 = vpop.xlane.xlu0 %1838
    %v1840 = vsel %vm1836, %v1647, -inf
    %1841 = vmax.xlane.f32.xlu0 %v1840
    %v1842 = vpop.xlane.xlu0 %1841
    %v1843 = vsub.f32 %v1644, %v1839
    %v1844 = vsub.f32 %v1647, %v1842
    %v1845 = vmul.f32 %v1843, 1.442695
    %v1846 = vpow.pop %v1845
    %v1847 = vmul.f32 %v1844, 1.442695
    %v1848 = vpow.pop %v1847
    %1851 = vrot.lane.b32.xlu0 %v1846, 112
    %v1852 = vpop.permute.xlu0 %1851
    %1853 = vrot.lane.b32.xlu0 %v1848, 112
    %v1854 = vpop.permute.xlu0 %1853
    %v1857 = vsel %vm1652, %v1852, 0.0
    %1858 = vadd.xlane.f32.xlu0 %v1857
    %v1859 = vpop.xlane.xlu0 %1858
    %v1860 = vsel %vm1652, %v1854, 0.0
    %1861 = vadd.xlane.f32.xlu0 %v1860
    %v1862 = vpop.xlane.xlu0 %1861
    %v1863 = vrcp.pop %v1859
    %v1864 = vmul.f32 1.0, %v1863
    %v1865 = vrcp.pop %v1862
    %v1866 = vmul.f32 1.0, %v1865
    %v1867 = vmul.f32 %v1846, %v1864
    %v1868 = vmul.f32 %v1848, %v1866
    %v1869 = vlog2.pop %v1859
    %v1870 = vmul.f32 %v1869, 0.6931472
    %v1871 = vlog2.pop %v1862
    %v1872 = vmul.f32 %v1871, 0.6931472
    %v1873 = vsub.f32 %v1843, %v1870
    %v1874 = vsub.f32 %v1844, %v1872
    %v1875 = vmul.f32 %v1867, %v1873
    %v1876 = vmul.f32 %v1868, %v1874
    %1879 = vrot.lane.b32.xlu0 %v1875, 112
    %v1880 = vpop.permute.xlu0 %1879
    %1881 = vrot.lane.b32.xlu0 %v1876, 112
    %v1882 = vpop.permute.xlu0 %1881
    %v1885 = vsel %vm1652, %v1880, 0.0
    %v1886 = vsel %vm1652, %v1882, 0.0
    %v1887 = vadd.f32 %v1885, %v1886
    %1888 = vadd.xlane.f32.xlu0 %v1887
    %v1889 = vpop.xlane.xlu0 %1888
    %v1890 = vrot.slane %v1889, 4
    %v1891 = vadd.f32 %v1889, %v1890
    %v1892 = vrot.slane %v1891, 2
    %v1893 = vadd.f32 %v1891, %v1892
    %v1894 = vrot.slane %v1893, 1
    %v1895 = vadd.f32 %v1893, %v1894
    %s1896 = vtos %v1895
    %s1897 = sadd.f32 %s1799, %s1896
    %v1898 = vmul.f32 %v1846, %v1708
    %v1899 = vmul.f32 %v1848, %v1710
    %v1900 = vrsqrt.pop %v1898
    %v1901 = vmul.f32 %v1898, %v1900
    %vm1902 = vcmp.eq.f32.partialorder %v1898, inf
    %v1903 = vsel %vm1902, %v1898, %v1901
    %vm1904 = vcmp.eq.f32.partialorder %v1898, 0.0
    %v1905 = vand.u32 %v1898, 2147483648
    %v1906 = vsel %vm1904, %v1905, %v1903
    %v1907 = vrsqrt.pop %v1899
    %v1908 = vmul.f32 %v1899, %v1907
    %vm1909 = vcmp.eq.f32.partialorder %v1899, inf
    %v1910 = vsel %vm1909, %v1899, %v1908
    %vm1911 = vcmp.eq.f32.partialorder %v1899, 0.0
    %v1912 = vand.u32 %v1899, 2147483648
    %v1913 = vsel %vm1911, %v1912, %v1910
    %1916 = vrot.lane.b32.xlu0 %v1906, 112
    %v1917 = vpop.permute.xlu0 %1916
    %1918 = vrot.lane.b32.xlu0 %v1913, 112
    %v1919 = vpop.permute.xlu0 %1918
    %v1922 = vsel %vm1652, %v1917, 0.0
    %1923 = vadd.xlane.f32.xlu0 %v1922
    %v1924 = vpop.xlane.xlu0 %1923
    %v1925 = vsel %vm1652, %v1919, 0.0
    %1926 = vadd.xlane.f32.xlu0 %v1925
    %v1927 = vpop.xlane.xlu0 %1926
    %v1928 = vrcp.pop %v1924
    %v1929 = vmul.f32 1.0, %v1928
    %v1930 = vrcp.pop %v1927
    %v1931 = vmul.f32 1.0, %v1930
    %v1932 = vmul.f32 %v1906, %v1929
    %v1933 = vmul.f32 %v1913, %v1931
    %vm1934 = vcmask 261312
    %v1935 = vsel %vm1934, %v1644, -inf
    %1936 = vmax.xlane.f32.xlu0 %v1935
    %v1937 = vpop.xlane.xlu0 %1936
    %v1938 = vsel %vm1934, %v1647, -inf
    %1939 = vmax.xlane.f32.xlu0 %v1938
    %v1940 = vpop.xlane.xlu0 %1939
    %v1941 = vsub.f32 %v1644, %v1937
    %v1942 = vsub.f32 %v1647, %v1940
    %v1943 = vmul.f32 %v1941, 1.442695
    %v1944 = vpow.pop %v1943
    %v1945 = vmul.f32 %v1942, 1.442695
    %v1946 = vpow.pop %v1945
    %1949 = vrot.lane.b32.xlu0 %v1944, 104
    %v1950 = vpop.permute.xlu0 %1949
    %1951 = vrot.lane.b32.xlu0 %v1946, 104
    %v1952 = vpop.permute.xlu0 %1951
    %v1955 = vsel %vm1652, %v1950, 0.0
    %1956 = vadd.xlane.f32.xlu0 %v1955
    %v1957 = vpop.xlane.xlu0 %1956
    %v1958 = vsel %vm1652, %v1952, 0.0
    %1959 = vadd.xlane.f32.xlu0 %v1958
    %v1960 = vpop.xlane.xlu0 %1959
    %v1961 = vrcp.pop %v1957
    %v1962 = vmul.f32 1.0, %v1961
    %v1963 = vrcp.pop %v1960
    %v1964 = vmul.f32 1.0, %v1963
    %v1965 = vmul.f32 %v1944, %v1962
    %v1966 = vmul.f32 %v1946, %v1964
    %v1967 = vlog2.pop %v1957
    %v1968 = vmul.f32 %v1967, 0.6931472
    %v1969 = vlog2.pop %v1960
    %v1970 = vmul.f32 %v1969, 0.6931472
    %v1971 = vsub.f32 %v1941, %v1968
    %v1972 = vsub.f32 %v1942, %v1970
    %v1973 = vmul.f32 %v1965, %v1971
    %v1974 = vmul.f32 %v1966, %v1972
    %1977 = vrot.lane.b32.xlu0 %v1973, 104
    %v1978 = vpop.permute.xlu0 %1977
    %1979 = vrot.lane.b32.xlu0 %v1974, 104
    %v1980 = vpop.permute.xlu0 %1979
    %v1983 = vsel %vm1652, %v1978, 0.0
    %v1984 = vsel %vm1652, %v1980, 0.0
    %v1985 = vadd.f32 %v1983, %v1984
    %1986 = vadd.xlane.f32.xlu0 %v1985
    %v1987 = vpop.xlane.xlu0 %1986
    %v1988 = vrot.slane %v1987, 4
    %v1989 = vadd.f32 %v1987, %v1988
    %v1990 = vrot.slane %v1989, 2
    %v1991 = vadd.f32 %v1989, %v1990
    %v1992 = vrot.slane %v1991, 1
    %v1993 = vadd.f32 %v1991, %v1992
    %s1994 = vtos %v1993
    %s1995 = sadd.f32 %s1897, %s1994
    %v1996 = vmul.f32 %v1944, %v1708
    %v1997 = vmul.f32 %v1946, %v1710
    %v1998 = vrsqrt.pop %v1996
    %v1999 = vmul.f32 %v1996, %v1998
    %vm2000 = vcmp.eq.f32.partialorder %v1996, inf
    %v2001 = vsel %vm2000, %v1996, %v1999
    %vm2002 = vcmp.eq.f32.partialorder %v1996, 0.0
    %v2003 = vand.u32 %v1996, 2147483648
    %v2004 = vsel %vm2002, %v2003, %v2001
    %v2005 = vrsqrt.pop %v1997
    %v2006 = vmul.f32 %v1997, %v2005
    %vm2007 = vcmp.eq.f32.partialorder %v1997, inf
    %v2008 = vsel %vm2007, %v1997, %v2006
    %vm2009 = vcmp.eq.f32.partialorder %v1997, 0.0
    %v2010 = vand.u32 %v1997, 2147483648
    %v2011 = vsel %vm2009, %v2010, %v2008
    %2014 = vrot.lane.b32.xlu0 %v2004, 104
    %v2015 = vpop.permute.xlu0 %2014
    %2016 = vrot.lane.b32.xlu0 %v2011, 104
    %v2017 = vpop.permute.xlu0 %2016
    %v2020 = vsel %vm1652, %v2015, 0.0
    %2021 = vadd.xlane.f32.xlu0 %v2020
    %v2022 = vpop.xlane.xlu0 %2021
    %v2023 = vsel %vm1652, %v2017, 0.0
    %2024 = vadd.xlane.f32.xlu0 %v2023
    %v2025 = vpop.xlane.xlu0 %2024
    %v2026 = vrcp.pop %v2022
    %v2027 = vmul.f32 1.0, %v2026
    %v2028 = vrcp.pop %v2025
    %v2029 = vmul.f32 1.0, %v2028
    %v2030 = vmul.f32 %v2004, %v2027
    %v2031 = vmul.f32 %v2011, %v2029
    %v2032 = vsel %vm1652, %v1736, %v1834
    %v2033 = vsel %vm1652, %v1737, %v1835
    %vm2034 = vcmask 130048
    %v2035 = vsel %vm2034, %v2032, %v1932
    %v2036 = vsel %vm2034, %v2033, %v1933
    %vm2037 = vcmask 195584
    %v2038 = vsel %vm2037, %v2035, %v2030
    %v2039 = vsel %vm2037, %v2036, %v2031
    %v2040 = vpack.c.bf16 %v2039, %v2038
    %v2041 = vld [vmem:[%s7] sm:$0xf]
    %v2042 = vld [vmem:[%s7 + $0x4] sm:$0xf]
    %v2043 = vld [vmem:[%s7 + $0x8] sm:$0xf]
    %v2044 = vld [vmem:[%s7 + $0xc] sm:$0xf]
    %v2049 = vunpack.c.l.b16 %v2041
    %v2050 = vunpack.c.l.b16 %v2042
    %v2051 = vunpack.c.l.b16 %v2043
    %v2052 = vunpack.c.l.b16 %v2044
    %v2053 = vpack.c.b16 %v2050, %v2049
    %v2054 = vpack.c.b16 %v2052, %v2051
    %vm2057 = vcmask 261120
    %v2059 = vsel %vm2057, %v2040, 0
    %2061 = vmatprep.subr.bf16.mxu0 0
    %2062 = vmatpush1.bf16.msra.mxu0 %v2053
    %2063 = vmatprep.subr.bf16.mxu0 0
    %2064 = vmatpush1.bf16.msra.mxu0 %v2054
    %2065 = vmatprep.subr.bf16.mxu0 0
    %2066 = vmatpush1.bf16.msra.mxu0 0
    %2067 = vmatprep.subr.bf16.mxu0 0
    %2068 = vmatpush1.bf16.msra.mxu0 0
    %2069 = vmatprep.subr.bf16.mxu0 0
    %2070 = vmatpush1.bf16.msra.mxu0 0
    %2071 = vmatprep.subr.bf16.mxu0 0
    %2072 = vmatpush1.bf16.msra.mxu0 0
    %2073 = vmatprep.subr.bf16.mxu0 0
    %2074 = vmatpush1.bf16.msra.mxu0 0
    %2075 = vmatprep.subr.bf16.mxu0 0
    %2076 = vmatpush1.bf16.msra.mxu0 0
    %2077 = vmatprep.subr.bf16.mxu0 0
    %2078 = vmatpush1.bf16.msra.mxu0 0
    %2079 = vmatprep.subr.bf16.mxu0 0
    %2080 = vmatpush1.bf16.msra.mxu0 0
    %2081 = vmatprep.subr.bf16.mxu0 0
    %2082 = vmatpush1.bf16.msra.mxu0 0
    %2083 = vmatprep.subr.bf16.mxu0 0
    %2084 = vmatpush1.bf16.msra.mxu0 0
    %2085 = vmatprep.subr.bf16.mxu0 0
    %2086 = vmatpush1.bf16.msra.mxu0 0
    %2087 = vmatprep.subr.bf16.mxu0 0
    %2088 = vmatpush1.bf16.msra.mxu0 0
    %2089 = vmatprep.subr.bf16.mxu0 0
    %2090 = vmatpush1.bf16.msra.mxu0 0
    %2091 = vmatprep.subr.bf16.mxu0 0
    %2092 = vmatpush1.bf16.msra.mxu0 0
    %2093 = vmatprep.mubr.bf16.mxu0 0
    %2094 = vmatmul.mubr.bf16.gmra.mrb[0].mxu0 %v2059
    %v2095 = vpop.f32.mrb[0].mxu0
    %v2096 = vadd.f32 0.0, %v2095
    %v2097 = vpop.f32.mrb[0].mxu0
    %v2098 = vpop.f32.mrb[0].mxu0
    %v2099 = vadd.f32 0.0, %v2098
    %v2100 = vpop.f32.mrb[0].mxu0
    %2101 = vdwg.mxu0
    %2104 = vrot.lane.b32.xlu0 %v1571, 64
    %v2105 = vpop.permute.xlu0 %2104
    %2106 = vrot.lane.b32.xlu0 %v1574, 64
    %v2107 = vpop.permute.xlu0 %2106
    %v2110 = vsel %vm275, %v2096, %v2105
    %v2111 = vsel %vm275, %v2099, %v2107
    %2112 = vst [vmem:[#allocation2] sm:$0xff] %v2110
    %2113 = vst [vmem:[#allocation2 + $0x8] sm:$0xff] %v2111
    %s2114 = sadd.f32 %s614, %s1995
    %s2115 = sadd.f32 %s2114, 243.60834
    %v2116 = vrcp.pop 5.0
    %s2117 = vtos %v2116
    %s2118 = smul.f32 %s2115, %s2117
    %v2119 = vstv %s2118
    %v2120 = vadd.f32 %v2119, 0.0
    %2121 = vst [vmem:[#allocation4] sm:$0x1] %v2120
    // Predicated region
    $region34: #{tpu_custom_call.1} parent=1 // pred_check
      _
    $region35: #{tpu_custom_call.1} parent=1 // pred_check_branch
      %2123 = sbr.rel (0) target = $region37
    $region36: #{tpu_custom_call.1} parent=1 // pred_region
      %s2125 = ssub.s32 256, 256
      %2126 = vsyncadd [#allocation3], %s2125
      %s2127 = sshll.u32 [#allocation2], 4
      %s2128 = int_to_ptr.vmem [resolvable:$true] %s2127
      %2133 = dma.vmem_to_hbm [thread:$0]  %s2128, 256, %s8, [#allocation3], 128, 128, 8
    $region37: #{tpu_custom_call.1} parent=1 // pred_fallthru
      _
    // Predicated region
    $region38: #{tpu_custom_call.1} parent=1 // pred_check
      _
    $region39: #{tpu_custom_call.1} parent=1 // pred_check_branch
      %2135 = sbr.rel (0) target = $region41
    $region40: #{tpu_custom_call.1} parent=1 // pred_region
      %s2137 = ssub.s32 16, 16
      %2138 = vsyncadd [#allocation5], %s2137
      %s2140 = sshll.u32 [#allocation4], 4
      %s2141 = int_to_ptr.vmem [resolvable:$true] %s2140
      %2143 = dma.vmem_to_hbm [thread:$0]  %s2141, 16, %s9, [#allocation5]
    $region41: #{tpu_custom_call.1} parent=1 // pred_fallthru
      _
    // Predicated region
    $region42: #{tpu_custom_call.1} parent=1 // pred_check
      _
    $region43: #{tpu_custom_call.1} parent=1 // pred_check_branch
      %2145 = sbr.rel (0) target = $region45
    $region44: #{tpu_custom_call.1} parent=1 // pred_region
      %2146 = dma.done [#allocation3], 256
    $region45: #{tpu_custom_call.1} parent=1 // pred_fallthru
      _
    // Predicated region
    $region46: #{tpu_custom_call.1} parent=1 // pred_check
      _
    $region47: #{tpu_custom_call.1} parent=1 // pred_check_branch
      %2148 = sbr.rel (0) target = $region49
    $region48: #{tpu_custom_call.1} parent=1 // pred_region
      %2149 = dma.done [#allocation5], 16
    $region49: #{tpu_custom_call.1} parent=1 // pred_fallthru
      _
    %2150 = vsyncpa [#allocation3], 1
    %2151 = vsyncpa [#allocation5], 1

</llo_original>
